<compile_context>
chip_gen: v7x
topology: tpu7x:2x2x1
jax: 0.10.0
libtpu: 0.0.40
codegen_flags: <defaults>
</compile_context>

<pallas_src>
import jax
import jax.numpy as jnp
from jax import lax
from jax.experimental import pallas as pl
from jax.experimental.pallas import tpu as pltpu

INPUT_SIZE = 1477
HIDDEN_SIZE = 240
OUT_SIZE = 24

H_PAD = 256      # hidden 240 -> 256 : full lanes, one 256-wide MXU tile / step
O_PAD = 128      # output 24 -> 128  : lane-dense (unmasked) output stores
SEQ_TILE = 64    # seq-chunk streamed through VMEM (bounded footprint)


def rnn_recurrence_kernel(p_ref, whh_ref, wout_ref, y_ref, h_carry, h_slab):
    """One seq-chunk of the relu-RNN recurrence + fused output projection.

    p_ref   : (T, B_pad, H_PAD)  pre-activations  x_t @ W_ih^T + b_ih + b_hh
    whh_ref : (H_PAD, H_PAD)     W_hh^T, zero-padded
    wout_ref: (H_PAD, O_PAD)     W_out^T, zero-padded
    y_ref   : (T, B_pad, O_PAD)  chunk output projection (b_out added outside)
    h_carry : VMEM (B_pad, H_PAD)    hidden state carried across seq chunks
    h_slab  : VMEM (T, B_pad, H_PAD) per-chunk hidden states (VMEM-only)
    """
    @pl.when(pl.program_id(0) == 0)
    def _():
        h_carry[...] = jnp.zeros_like(h_carry)          # h_0 = 0

    t_chunk = p_ref.shape[0]

    def step(t, h_prev):
        # W_hh is read from VMEM inside the loop (NOT hoisted into vregs:
        # 256x256 f32 = the entire vreg file).
        pre = p_ref[t] + jnp.dot(h_prev, whh_ref[...],
                                 preferred_element_type=jnp.float32)
        h_new = jnp.maximum(pre, 0.0)                   # relu nonlinearity
        h_slab[t] = h_new                               # 256-wide unmasked store
        return h_new

    # Partial unroll: serial dependence means unroll only buys scheduler
    # visibility, so cap it at 8 (full unroll for tiny chunks).
    h_last = lax.fori_loop(0, t_chunk, step, h_carry[...],
                           unroll=min(t_chunk, 8))
    h_carry[...] = h_last                               # carry to next chunk

    # Fused output projection: one chunk-wide MXU matmul, 128-wide lane-dense
    # store; the hidden slab never leaves VMEM.
    y_ref[...] = jnp.einsum('tbh,ho->tbo', h_slab[...], wout_ref[...],
                            preferred_element_type=jnp.float32)


def rnn_model_forward(x, w_ih, w_hh, b_ih, b_hh, w_out, b_out):
    """x: (seq_len, batch, INPUT_SIZE) f32 -> (seq_len, batch, OUT_SIZE) f32."""
    seq_len, batch, _ = x.shape
    b_pad = ((batch + 7) // 8) * 8                       # f32 sublane granularity
    t_tile = min(SEQ_TILE, seq_len)
    n_chunks = -(-seq_len // t_tile)
    seq_pad = n_chunks * t_tile

    # Zero-pad weights once so the hoisted projection directly produces a
    # lane-dense (seq_pad, b_pad, 256) P slab.  Padded W_ih rows / bias / W_hh
    # rows+cols are zero, so padded hidden lanes stay exactly 0 through relu.
    w_ih_pad = jnp.zeros((H_PAD, INPUT_SIZE), jnp.float32).at[:HIDDEN_SIZE].set(w_ih)
    bias_pad = jnp.zeros((H_PAD,), jnp.float32).at[:HIDDEN_SIZE].set(b_ih + b_hh)
    whh_pad = (jnp.zeros((H_PAD, H_PAD), jnp.float32)
               .at[:HIDDEN_SIZE, :HIDDEN_SIZE].set(w_hh.T))
    wout_pad = (jnp.zeros((H_PAD, O_PAD), jnp.float32)
                .at[:HIDDEN_SIZE, :OUT_SIZE].set(w_out.T))

    x_pad = jnp.zeros((seq_pad, b_pad, INPUT_SIZE), jnp.float32)
    x_pad = x_pad.at[:seq_len, :batch].set(x)

    # ---- 1) Hoisted input projection: independent of h_{t-1}; one big XLA
    #         matmul off the serial critical path (both TCs usable on v7x).
    p = x_pad.reshape(seq_pad * b_pad, INPUT_SIZE) @ w_ih_pad.T + bias_pad
    p = p.reshape(seq_pad, b_pad, H_PAD)

    # ---- 2) Streamed Pallas recurrence + fused output projection.
    vmem_bytes = (2 * t_tile * b_pad * H_PAD * 4              # P chunk (x2 buf)
                  + 2 * t_tile * b_pad * O_PAD * 4            # Y chunk (x2 buf)
                  + 2 * (H_PAD * H_PAD + H_PAD * O_PAD) * 4   # weights
                  + (t_tile + 1) * b_pad * H_PAD * 4)         # scratch
    vmem_limit = max(32 << 20, vmem_bytes + (8 << 20))

    y_pad = pl.pallas_call(
        rnn_recurrence_kernel,
        out_shape=jax.ShapeDtypeStruct((seq_pad, b_pad, O_PAD), jnp.float32),
        grid_spec=pltpu.PrefetchScalarGridSpec(
            num_scalar_prefetch=0,
            grid=(n_chunks,),
            in_specs=[
                pl.BlockSpec((t_tile, b_pad, H_PAD), lambda c: (c, 0, 0)),
                pl.BlockSpec((H_PAD, H_PAD), lambda c: (0, 0)),
                pl.BlockSpec((H_PAD, O_PAD), lambda c: (0, 0)),
            ],
            out_specs=pl.BlockSpec((t_tile, b_pad, O_PAD), lambda c: (c, 0, 0)),
            scratch_shapes=[
                pltpu.VMEM((b_pad, H_PAD), jnp.float32),          # h carry
                pltpu.VMEM((t_tile, b_pad, H_PAD), jnp.float32),  # h chunk slab
            ],
        ),
        compiler_params=pltpu.CompilerParams(
            dimension_semantics=("arbitrary",),     # recurrence is sequential
            vmem_limit_bytes=vmem_limit),
    )(p, whh_pad, wout_pad)

    # ---- 3) Slice off padding, add the output bias (tiny elementwise add).
    return y_pad[:seq_len, :batch, :OUT_SIZE] + b_out


def rnn_model_reference(x, w_ih, w_hh, b_ih, b_hh, w_out, b_out):
    """Plain-JAX reference matching PyTorch nn.RNN(relu) + Linear semantics."""
    def step(h, x_t):
        h_new = jax.nn.relu(x_t @ w_ih.T + b_ih + h @ w_hh.T + b_hh)
        return h_new, h_new
    h0 = jnp.zeros((x.shape[1], HIDDEN_SIZE), jnp.float32)
    _, hs = lax.scan(step, h0, x)                      # (seq, batch, hidden)
    return hs @ w_out.T + b_out


if __name__ == "__main__":
    seq_len, batch = 8, 2

    key = jax.random.PRNGKey(0)
    ks = jax.random.split(key, 8)
    # Deterministic init mimicking PyTorch's U(-1/sqrt(hidden), 1/sqrt(hidden)).
    bound = 1.0 / jnp.sqrt(jnp.float32(HIDDEN_SIZE))
    u = lambda k, shape: jax.random.uniform(k, shape, jnp.float32, -bound, bound)

    w_ih = u(ks[0], (HIDDEN_SIZE, INPUT_SIZE))
    w_hh = u(ks[1], (HIDDEN_SIZE, HIDDEN_SIZE))
    b_ih = u(ks[2], (HIDDEN_SIZE,))
    b_hh = u(ks[3], (HIDDEN_SIZE,))
    w_out = u(ks[4], (OUT_SIZE, HIDDEN_SIZE))
    b_out = u(ks[5], (OUT_SIZE,))

    x = jax.random.normal(ks[6], (seq_len, batch, INPUT_SIZE), jnp.float32)

    fwd = jax.jit(rnn_model_forward)   # single compiled program (one dispatch)
    y = fwd(x, w_ih, w_hh, b_ih, b_hh, w_out, b_out)
    y = jax.block_until_ready(y)

    y_ref = rnn_model_reference(x, w_ih, w_hh, b_ih, b_hh, w_out, b_out)
    assert y.shape == (seq_len, batch, OUT_SIZE)
    assert jnp.allclose(y, y_ref, atol=1e-4, rtol=1e-4)

    print("KERNEL_OK")
</pallas_src>

<mosaic_0001>
module attributes {stable_mosaic.version = 11 : i64} {
  func.func @rnn_recurrence_kernel(%arg0: i32, %arg1: memref<8x8x256xf32, #tpu.memory_space<vmem>>, %arg2: memref<256x256xf32, #tpu.memory_space<vmem>>, %arg3: memref<256x128xf32, #tpu.memory_space<vmem>>, %arg4: memref<8x8x128xf32, #tpu.memory_space<vmem>>, %arg5: memref<8x256xf32, #tpu.memory_space<vmem>>, %arg6: memref<8x8x256xf32, #tpu.memory_space<vmem>>) attributes {dimension_semantics = [#tpu.dimension_semantics<arbitrary>], iteration_bounds = array<i64: 1>, scalar_prefetch = 0 : i64, scratch_operands = 2 : i64, tpu.core_type = #tpu.core_type<tc>, window_params = [{transform_indices = @transform_0, window_bounds = array<i64: 8, 8, 256>}, {pipeline_mode = #tpu.pipeline_mode<synchronous>, transform_indices = @transform_1, window_bounds = array<i64: 256, 256>}, {pipeline_mode = #tpu.pipeline_mode<synchronous>, transform_indices = @transform_2, window_bounds = array<i64: 256, 128>}, {transform_indices = @transform_3, window_bounds = array<i64: 8, 8, 128>}]} {
    %c0_i32 = arith.constant 0 : i32
    %0 = arith.cmpi eq, %arg0, %c0_i32 : i32
    %1 = arith.extui %0 : i1 to i32
    %c0_i32_0 = arith.constant 0 : i32
    %2 = arith.cmpi ne, %1, %c0_i32_0 : i32
    scf.if %2 {
      %cst_77 = arith.constant 0.000000e+00 : f32
      %105 = vector.broadcast %cst_77 : f32 to vector<8x256xf32>
      %c0_78 = arith.constant 0 : index
      %c0_79 = arith.constant 0 : index
      %106 = vector.load %arg5[%c0_78, %c0_79] : memref<8x256xf32, #tpu.memory_space<vmem>>, vector<8x256xf32>
      tpu.vector_store %arg5[%c0_78, %c0_79], %105 {strides = array<i32>} : memref<8x256xf32, #tpu.memory_space<vmem>>, vector<8x256xf32>,
    } else {
    }
    %c0 = arith.constant 0 : index
    %c0_1 = arith.constant 0 : index
    %3 = vector.load %arg5[%c0, %c0_1] : memref<8x256xf32, #tpu.memory_space<vmem>>, vector<8x256xf32>
    %c0_i32_2 = arith.constant 0 : i32
    %4 = arith.index_cast %c0_i32_2 : i32 to index
    %c0_3 = arith.constant 0 : index
    %c0_4 = arith.constant 0 : index
    %5 = vector.load %arg1[%4, %c0_3, %c0_4] : memref<8x8x256xf32, #tpu.memory_space<vmem>>, vector<1x8x256xf32>
    %6 = vector.shape_cast %5 : vector<1x8x256xf32> to vector<8x256xf32>
    %c0_5 = arith.constant 0 : index
    %c0_6 = arith.constant 0 : index
    %7 = vector.load %arg2[%c0_5, %c0_6] : memref<256x256xf32, #tpu.memory_space<vmem>>, vector<256x256xf32>
    %cst = arith.constant dense<0.000000e+00> : vector<8x256xf32>
    %8 = tpu.matmul %3, %7, %cst {dimension_numbers = #tpu.dot_dimension_numbers<[1], [0], [0], [1], [0, 0, 1, 1], [], []>} : vector<8x256xf32>, vector<256x256xf32>, vector<8x256xf32> -> vector<8x256xf32>
    %9 = arith.addf %6, %8 : vector<8x256xf32>
    %cst_7 = arith.constant 0.000000e+00 : f32
    %10 = vector.broadcast %cst_7 : f32 to vector<8x256xf32>
    %11 = arith.maximumf %9, %10 : vector<8x256xf32>
    %12 = arith.index_cast %c0_i32_2 : i32 to index
    %c0_8 = arith.constant 0 : index
    %c0_9 = arith.constant 0 : index
    %13 = vector.load %arg6[%12, %c0_8, %c0_9] : memref<8x8x256xf32, #tpu.memory_space<vmem>>, vector<1x8x256xf32>
    %14 = vector.shape_cast %13 : vector<1x8x256xf32> to vector<8x256xf32>
    %15 = vector.shape_cast %11 : vector<8x256xf32> to vector<1x8x256xf32>
    tpu.vector_store %arg6[%12, %c0_8, %c0_9], %15 {strides = array<i32>} : memref<8x8x256xf32, #tpu.memory_space<vmem>>, vector<1x8x256xf32>,
    %c1_i32 = arith.constant 1 : i32
    %16 = arith.index_cast %c1_i32 : i32 to index
    %c0_10 = arith.constant 0 : index
    %c0_11 = arith.constant 0 : index
    %17 = vector.load %arg1[%16, %c0_10, %c0_11] : memref<8x8x256xf32, #tpu.memory_space<vmem>>, vector<1x8x256xf32>
    %18 = vector.shape_cast %17 : vector<1x8x256xf32> to vector<8x256xf32>
    %c0_12 = arith.constant 0 : index
    %c0_13 = arith.constant 0 : index
    %19 = vector.load %arg2[%c0_12, %c0_13] : memref<256x256xf32, #tpu.memory_space<vmem>>, vector<256x256xf32>
    %cst_14 = arith.constant dense<0.000000e+00> : vector<8x256xf32>
    %20 = tpu.matmul %11, %19, %cst_14 {dimension_numbers = #tpu.dot_dimension_numbers<[1], [0], [0], [1], [0, 0, 1, 1], [], []>} : vector<8x256xf32>, vector<256x256xf32>, vector<8x256xf32> -> vector<8x256xf32>
    %21 = arith.addf %18, %20 : vector<8x256xf32>
    %cst_15 = arith.constant 0.000000e+00 : f32
    %22 = vector.broadcast %cst_15 : f32 to vector<8x256xf32>
    %23 = arith.maximumf %21, %22 : vector<8x256xf32>
    %24 = arith.index_cast %c1_i32 : i32 to index
    %c0_16 = arith.constant 0 : index
    %c0_17 = arith.constant 0 : index
    %25 = vector.load %arg6[%24, %c0_16, %c0_17] : memref<8x8x256xf32, #tpu.memory_space<vmem>>, vector<1x8x256xf32>
    %26 = vector.shape_cast %25 : vector<1x8x256xf32> to vector<8x256xf32>
    %27 = vector.shape_cast %23 : vector<8x256xf32> to vector<1x8x256xf32>
    tpu.vector_store %arg6[%24, %c0_16, %c0_17], %27 {strides = array<i32>} : memref<8x8x256xf32, #tpu.memory_space<vmem>>, vector<1x8x256xf32>,
    %c2_i32 = arith.constant 2 : i32
    %28 = arith.index_cast %c2_i32 : i32 to index
    %c0_18 = arith.constant 0 : index
    %c0_19 = arith.constant 0 : index
    %29 = vector.load %arg1[%28, %c0_18, %c0_19] : memref<8x8x256xf32, #tpu.memory_space<vmem>>, vector<1x8x256xf32>
    %30 = vector.shape_cast %29 : vector<1x8x256xf32> to vector<8x256xf32>
    %c0_20 = arith.constant 0 : index
    %c0_21 = arith.constant 0 : index
    %31 = vector.load %arg2[%c0_20, %c0_21] : memref<256x256xf32, #tpu.memory_space<vmem>>, vector<256x256xf32>
    %cst_22 = arith.constant dense<0.000000e+00> : vector<8x256xf32>
    %32 = tpu.matmul %23, %31, %cst_22 {dimension_numbers = #tpu.dot_dimension_numbers<[1], [0], [0], [1], [0, 0, 1, 1], [], []>} : vector<8x256xf32>, vector<256x256xf32>, vector<8x256xf32> -> vector<8x256xf32>
    %33 = arith.addf %30, %32 : vector<8x256xf32>
    %cst_23 = arith.constant 0.000000e+00 : f32
    %34 = vector.broadcast %cst_23 : f32 to vector<8x256xf32>
    %35 = arith.maximumf %33, %34 : vector<8x256xf32>
    %36 = arith.index_cast %c2_i32 : i32 to index
    %c0_24 = arith.constant 0 : index
    %c0_25 = arith.constant 0 : index
    %37 = vector.load %arg6[%36, %c0_24, %c0_25] : memref<8x8x256xf32, #tpu.memory_space<vmem>>, vector<1x8x256xf32>
    %38 = vector.shape_cast %37 : vector<1x8x256xf32> to vector<8x256xf32>
    %39 = vector.shape_cast %35 : vector<8x256xf32> to vector<1x8x256xf32>
    tpu.vector_store %arg6[%36, %c0_24, %c0_25], %39 {strides = array<i32>} : memref<8x8x256xf32, #tpu.memory_space<vmem>>, vector<1x8x256xf32>,
    %c3_i32 = arith.constant 3 : i32
    %40 = arith.index_cast %c3_i32 : i32 to index
    %c0_26 = arith.constant 0 : index
    %c0_27 = arith.constant 0 : index
    %41 = vector.load %arg1[%40, %c0_26, %c0_27] : memref<8x8x256xf32, #tpu.memory_space<vmem>>, vector<1x8x256xf32>
    %42 = vector.shape_cast %41 : vector<1x8x256xf32> to vector<8x256xf32>
    %c0_28 = arith.constant 0 : index
    %c0_29 = arith.constant 0 : index
    %43 = vector.load %arg2[%c0_28, %c0_29] : memref<256x256xf32, #tpu.memory_space<vmem>>, vector<256x256xf32>
    %cst_30 = arith.constant dense<0.000000e+00> : vector<8x256xf32>
    %44 = tpu.matmul %35, %43, %cst_30 {dimension_numbers = #tpu.dot_dimension_numbers<[1], [0], [0], [1], [0, 0, 1, 1], [], []>} : vector<8x256xf32>, vector<256x256xf32>, vector<8x256xf32> -> vector<8x256xf32>
    %45 = arith.addf %42, %44 : vector<8x256xf32>
    %cst_31 = arith.constant 0.000000e+00 : f32
    %46 = vector.broadcast %cst_31 : f32 to vector<8x256xf32>
    %47 = arith.maximumf %45, %46 : vector<8x256xf32>
    %48 = arith.index_cast %c3_i32 : i32 to index
    %c0_32 = arith.constant 0 : index
    %c0_33 = arith.constant 0 : index
    %49 = vector.load %arg6[%48, %c0_32, %c0_33] : memref<8x8x256xf32, #tpu.memory_space<vmem>>, vector<1x8x256xf32>
    %50 = vector.shape_cast %49 : vector<1x8x256xf32> to vector<8x256xf32>
    %51 = vector.shape_cast %47 : vector<8x256xf32> to vector<1x8x256xf32>
    tpu.vector_store %arg6[%48, %c0_32, %c0_33], %51 {strides = array<i32>} : memref<8x8x256xf32, #tpu.memory_space<vmem>>, vector<1x8x256xf32>,
    %c4_i32 = arith.constant 4 : i32
    %52 = arith.index_cast %c4_i32 : i32 to index
    %c0_34 = arith.constant 0 : index
    %c0_35 = arith.constant 0 : index
    %53 = vector.load %arg1[%52, %c0_34, %c0_35] : memref<8x8x256xf32, #tpu.memory_space<vmem>>, vector<1x8x256xf32>
    %54 = vector.shape_cast %53 : vector<1x8x256xf32> to vector<8x256xf32>
    %c0_36 = arith.constant 0 : index
    %c0_37 = arith.constant 0 : index
    %55 = vector.load %arg2[%c0_36, %c0_37] : memref<256x256xf32, #tpu.memory_space<vmem>>, vector<256x256xf32>
    %cst_38 = arith.constant dense<0.000000e+00> : vector<8x256xf32>
    %56 = tpu.matmul %47, %55, %cst_38 {dimension_numbers = #tpu.dot_dimension_numbers<[1], [0], [0], [1], [0, 0, 1, 1], [], []>} : vector<8x256xf32>, vector<256x256xf32>, vector<8x256xf32> -> vector<8x256xf32>
    %57 = arith.addf %54, %56 : vector<8x256xf32>
    %cst_39 = arith.constant 0.000000e+00 : f32
    %58 = vector.broadcast %cst_39 : f32 to vector<8x256xf32>
    %59 = arith.maximumf %57, %58 : vector<8x256xf32>
    %60 = arith.index_cast %c4_i32 : i32 to index
    %c0_40 = arith.constant 0 : index
    %c0_41 = arith.constant 0 : index
    %61 = vector.load %arg6[%60, %c0_40, %c0_41] : memref<8x8x256xf32, #tpu.memory_space<vmem>>, vector<1x8x256xf32>
    %62 = vector.shape_cast %61 : vector<1x8x256xf32> to vector<8x256xf32>
    %63 = vector.shape_cast %59 : vector<8x256xf32> to vector<1x8x256xf32>
    tpu.vector_store %arg6[%60, %c0_40, %c0_41], %63 {strides = array<i32>} : memref<8x8x256xf32, #tpu.memory_space<vmem>>, vector<1x8x256xf32>,
    %c5_i32 = arith.constant 5 : i32
    %64 = arith.index_cast %c5_i32 : i32 to index
    %c0_42 = arith.constant 0 : index
    %c0_43 = arith.constant 0 : index
    %65 = vector.load %arg1[%64, %c0_42, %c0_43] : memref<8x8x256xf32, #tpu.memory_space<vmem>>, vector<1x8x256xf32>
    %66 = vector.shape_cast %65 : vector<1x8x256xf32> to vector<8x256xf32>
    %c0_44 = arith.constant 0 : index
    %c0_45 = arith.constant 0 : index
    %67 = vector.load %arg2[%c0_44, %c0_45] : memref<256x256xf32, #tpu.memory_space<vmem>>, vector<256x256xf32>
    %cst_46 = arith.constant dense<0.000000e+00> : vector<8x256xf32>
    %68 = tpu.matmul %59, %67, %cst_46 {dimension_numbers = #tpu.dot_dimension_numbers<[1], [0], [0], [1], [0, 0, 1, 1], [], []>} : vector<8x256xf32>, vector<256x256xf32>, vector<8x256xf32> -> vector<8x256xf32>
    %69 = arith.addf %66, %68 : vector<8x256xf32>
    %cst_47 = arith.constant 0.000000e+00 : f32
    %70 = vector.broadcast %cst_47 : f32 to vector<8x256xf32>
    %71 = arith.maximumf %69, %70 : vector<8x256xf32>
    %72 = arith.index_cast %c5_i32 : i32 to index
    %c0_48 = arith.constant 0 : index
    %c0_49 = arith.constant 0 : index
    %73 = vector.load %arg6[%72, %c0_48, %c0_49] : memref<8x8x256xf32, #tpu.memory_space<vmem>>, vector<1x8x256xf32>
    %74 = vector.shape_cast %73 : vector<1x8x256xf32> to vector<8x256xf32>
    %75 = vector.shape_cast %71 : vector<8x256xf32> to vector<1x8x256xf32>
    tpu.vector_store %arg6[%72, %c0_48, %c0_49], %75 {strides = array<i32>} : memref<8x8x256xf32, #tpu.memory_space<vmem>>, vector<1x8x256xf32>,
    %c6_i32 = arith.constant 6 : i32
    %76 = arith.index_cast %c6_i32 : i32 to index
    %c0_50 = arith.constant 0 : index
    %c0_51 = arith.constant 0 : index
    %77 = vector.load %arg1[%76, %c0_50, %c0_51] : memref<8x8x256xf32, #tpu.memory_space<vmem>>, vector<1x8x256xf32>
    %78 = vector.shape_cast %77 : vector<1x8x256xf32> to vector<8x256xf32>
    %c0_52 = arith.constant 0 : index
    %c0_53 = arith.constant 0 : index
    %79 = vector.load %arg2[%c0_52, %c0_53] : memref<256x256xf32, #tpu.memory_space<vmem>>, vector<256x256xf32>
    %cst_54 = arith.constant dense<0.000000e+00> : vector<8x256xf32>
    %80 = tpu.matmul %71, %79, %cst_54 {dimension_numbers = #tpu.dot_dimension_numbers<[1], [0], [0], [1], [0, 0, 1, 1], [], []>} : vector<8x256xf32>, vector<256x256xf32>, vector<8x256xf32> -> vector<8x256xf32>
    %81 = arith.addf %78, %80 : vector<8x256xf32>
    %cst_55 = arith.constant 0.000000e+00 : f32
    %82 = vector.broadcast %cst_55 : f32 to vector<8x256xf32>
    %83 = arith.maximumf %81, %82 : vector<8x256xf32>
    %84 = arith.index_cast %c6_i32 : i32 to index
    %c0_56 = arith.constant 0 : index
    %c0_57 = arith.constant 0 : index
    %85 = vector.load %arg6[%84, %c0_56, %c0_57] : memref<8x8x256xf32, #tpu.memory_space<vmem>>, vector<1x8x256xf32>
    %86 = vector.shape_cast %85 : vector<1x8x256xf32> to vector<8x256xf32>
    %87 = vector.shape_cast %83 : vector<8x256xf32> to vector<1x8x256xf32>
    tpu.vector_store %arg6[%84, %c0_56, %c0_57], %87 {strides = array<i32>} : memref<8x8x256xf32, #tpu.memory_space<vmem>>, vector<1x8x256xf32>,
    %c7_i32 = arith.constant 7 : i32
    %88 = arith.index_cast %c7_i32 : i32 to index
    %c0_58 = arith.constant 0 : index
    %c0_59 = arith.constant 0 : index
    %89 = vector.load %arg1[%88, %c0_58, %c0_59] : memref<8x8x256xf32, #tpu.memory_space<vmem>>, vector<1x8x256xf32>
    %90 = vector.shape_cast %89 : vector<1x8x256xf32> to vector<8x256xf32>
    %c0_60 = arith.constant 0 : index
    %c0_61 = arith.constant 0 : index
    %91 = vector.load %arg2[%c0_60, %c0_61] : memref<256x256xf32, #tpu.memory_space<vmem>>, vector<256x256xf32>
    %cst_62 = arith.constant dense<0.000000e+00> : vector<8x256xf32>
    %92 = tpu.matmul %83, %91, %cst_62 {dimension_numbers = #tpu.dot_dimension_numbers<[1], [0], [0], [1], [0, 0, 1, 1], [], []>} : vector<8x256xf32>, vector<256x256xf32>, vector<8x256xf32> -> vector<8x256xf32>
    %93 = arith.addf %90, %92 : vector<8x256xf32>
    %cst_63 = arith.constant 0.000000e+00 : f32
    %94 = vector.broadcast %cst_63 : f32 to vector<8x256xf32>
    %95 = arith.maximumf %93, %94 : vector<8x256xf32>
    %96 = arith.index_cast %c7_i32 : i32 to index
    %c0_64 = arith.constant 0 : index
    %c0_65 = arith.constant 0 : index
    %97 = vector.load %arg6[%96, %c0_64, %c0_65] : memref<8x8x256xf32, #tpu.memory_space<vmem>>, vector<1x8x256xf32>
    %98 = vector.shape_cast %97 : vector<1x8x256xf32> to vector<8x256xf32>
    %99 = vector.shape_cast %95 : vector<8x256xf32> to vector<1x8x256xf32>
    tpu.vector_store %arg6[%96, %c0_64, %c0_65], %99 {strides = array<i32>} : memref<8x8x256xf32, #tpu.memory_space<vmem>>, vector<1x8x256xf32>,
    %c8_i32 = arith.constant 8 : i32
    %c0_66 = arith.constant 0 : index
    %c0_67 = arith.constant 0 : index
    %100 = vector.load %arg5[%c0_66, %c0_67] : memref<8x256xf32, #tpu.memory_space<vmem>>, vector<8x256xf32>
    tpu.vector_store %arg5[%c0_66, %c0_67], %95 {strides = array<i32>} : memref<8x256xf32, #tpu.memory_space<vmem>>, vector<8x256xf32>,
    %c0_68 = arith.constant 0 : index
    %c0_69 = arith.constant 0 : index
    %c0_70 = arith.constant 0 : index
    %101 = vector.load %arg6[%c0_68, %c0_69, %c0_70] : memref<8x8x256xf32, #tpu.memory_space<vmem>>, vector<8x8x256xf32>
    %c0_71 = arith.constant 0 : index
    %c0_72 = arith.constant 0 : index
    %102 = vector.load %arg3[%c0_71, %c0_72] : memref<256x128xf32, #tpu.memory_space<vmem>>, vector<256x128xf32>
    "tpu.trace_start"() <{level = 10 : i32, message = "tbh,ho->tbo"}> : () -> ()
    %cst_73 = arith.constant dense<0.000000e+00> : vector<8x8x128xf32>
    %103 = tpu.matmul %101, %102, %cst_73 {dimension_numbers = #tpu.dot_dimension_numbers<[2], [0], [0, 1], [1], [0, 0, 0, 1, 1, 1], [], []>} : vector<8x8x256xf32>, vector<256x128xf32>, vector<8x8x128xf32> -> vector<8x8x128xf32>
    "tpu.trace_stop"() : () -> ()
    %c0_74 = arith.constant 0 : index
    %c0_75 = arith.constant 0 : index
    %c0_76 = arith.constant 0 : index
    %104 = vector.load %arg4[%c0_74, %c0_75, %c0_76] : memref<8x8x128xf32, #tpu.memory_space<vmem>>, vector<8x8x128xf32>
    tpu.vector_store %arg4[%c0_74, %c0_75, %c0_76], %103 {strides = array<i32>} : memref<8x8x128xf32, #tpu.memory_space<vmem>>, vector<8x8x128xf32>,
    return
  }
  func.func @transform_0(%arg0: i32) -> (i32, i32, i32) {
    %c0_i32 = arith.constant 0 : i32
    %c0_i32_0 = arith.constant 0 : i32
    %c0_i32_1 = arith.constant 0 : i32
    return %arg0, %c0_i32, %c0_i32_0 : i32, i32, i32
  }
  func.func @transform_1(%arg0: i32) -> (i32, i32) {
    %c0_i32 = arith.constant 0 : i32
    %c0_i32_0 = arith.constant 0 : i32
    %c0_i32_1 = arith.constant 0 : i32
    return %c0_i32, %c0_i32_0 : i32, i32
  }
  func.func @transform_2(%arg0: i32) -> (i32, i32) {
    %c0_i32 = arith.constant 0 : i32
    %c0_i32_0 = arith.constant 0 : i32
    %c0_i32_1 = arith.constant 0 : i32
    return %c0_i32, %c0_i32_0 : i32, i32
  }
  func.func @transform_3(%arg0: i32) -> (i32, i32, i32) {
    %c0_i32 = arith.constant 0 : i32
    %c0_i32_0 = arith.constant 0 : i32
    %c0_i32_1 = arith.constant 0 : i32
    return %arg0, %c0_i32, %c0_i32_0 : i32, i32, i32
  }
}

</mosaic_0001>

<llo_original>
// kernel: rnn_model_forward.1
$region0: #{rnn_model_forward.1}
  #allocation0 [shape = 'u32[]', space=smem, size = 0x4, offset = 0x4, fixed_abs, tag = 'smem constant byte address 0x4 - core index']
  #allocation1 [shape = 'u32[144,128]{1,0:T(1,128)}', space=vmem, size = 0x12000, scoped, tag = 'internal scratch']
  #allocation2 [shape = 'f32[8,256]{1,0:T(8,128)}', space=vmem, size = 0x2000, scoped, tag = 'scratch operand']
  #allocation3 [shape = 'f32[8,8,256]{2,1,0:T(8,128)}', space=vmem, size = 0x10000, scoped, tag = 'scratch operand']
  %s0 = inlined_call_operand.vmem [shape: f32[8,8,256], index: 0, kind: input, shape index: {}]
  %s1 = inlined_call_operand.vmem [shape: f32[256,256], index: 1, kind: input, shape index: {}]
  %s2 = inlined_call_operand.vmem [shape: f32[256,128], index: 2, kind: input, shape index: {}]
  %s3 = inlined_call_operand.vmem [shape: f32[8,8,128], index: 3, kind: output, shape index: {}]
  %s4 = sld [smem:[#allocation0]]
  $region26: #{rnn_model_forward.1} parent=0
    _
  %s6 = ssub.s32 1, %s4
  %s7 = scalar_select 0, %s6, %s4
  // Predicated region
  $region2: #{rnn_model_forward.1} parent=0 // pred_check
    _
  $region3: #{rnn_model_forward.1} parent=0 // pred_check_branch
    %9 = sbr.rel (0) target = $region5
  $region4: #{rnn_model_forward.1} parent=0 // pred_region
    _
  $region5: #{rnn_model_forward.1} parent=0 // pred_fallthru
    _
  // Predicated region
  $region6: #{rnn_model_forward.1} parent=0 // pred_check
    _
  $region7: #{rnn_model_forward.1} parent=0 // pred_check_branch
    %11 = sbr.rel (0) target = $region9
  $region8: #{rnn_model_forward.1} parent=0 // pred_region
    _
  $region9: #{rnn_model_forward.1} parent=0 // pred_fallthru
    _
  // Predicated region
  $region10: #{rnn_model_forward.1} parent=0 // pred_check
    _
  $region11: #{rnn_model_forward.1} parent=0 // pred_check_branch
    %13 = sbr.rel (0) target = $region13
  $region12: #{rnn_model_forward.1} parent=0 // pred_region
    _
  $region13: #{rnn_model_forward.1} parent=0 // pred_fallthru
    _
  %p14 = scmp.eq.s32.totalorder 0, 0
  // Predicated region
  $region14: #{rnn_model_forward.1} parent=0 // pred_check
    %p15 = pneg %p14
  $region15: #{rnn_model_forward.1} parent=0 // pred_check_branch
    %17 = sbr.rel (%p15) target = $region17
  $region16: #{rnn_model_forward.1} parent=0 // pred_region
    %18 = vst [vmem:[#allocation2] sm:$0xff] 0.0
    %19 = vst [vmem:[#allocation2 + $0x8] sm:$0xff] 0.0
  $region17: #{rnn_model_forward.1} parent=0 // pred_fallthru
    _
  %v20 = vld [vmem:[#allocation2] sm:$0xff]
  %v21 = vld [vmem:[#allocation2 + $0x8] sm:$0xff]
  %v22 = vld [vmem:[%s0] sm:$0xff]
  %v23 = vld [vmem:[%s0 + $0x8] sm:$0xff]
  %v24 = vld [vmem:[%s1] sm:$0xff]
  %v25 = vld [vmem:[%s1 + $0x8] sm:$0xff]
  %v26 = vld [vmem:[%s1 + $0x10] sm:$0xff]
  %v27 = vld [vmem:[%s1 + $0x18] sm:$0xff]
  %v28 = vld [vmem:[%s1 + $0x20] sm:$0xff]
  %v29 = vld [vmem:[%s1 + $0x28] sm:$0xff]
  %v30 = vld [vmem:[%s1 + $0x30] sm:$0xff]
  %v31 = vld [vmem:[%s1 + $0x38] sm:$0xff]
  %v32 = vld [vmem:[%s1 + $0x40] sm:$0xff]
  %v33 = vld [vmem:[%s1 + $0x48] sm:$0xff]
  %v34 = vld [vmem:[%s1 + $0x50] sm:$0xff]
  %v35 = vld [vmem:[%s1 + $0x58] sm:$0xff]
  %v36 = vld [vmem:[%s1 + $0x60] sm:$0xff]
  %v37 = vld [vmem:[%s1 + $0x68] sm:$0xff]
  %v38 = vld [vmem:[%s1 + $0x70] sm:$0xff]
  %v39 = vld [vmem:[%s1 + $0x78] sm:$0xff]
  %v40 = vld [vmem:[%s1 + $0x80] sm:$0xff]
  %v41 = vld [vmem:[%s1 + $0x88] sm:$0xff]
  %v42 = vld [vmem:[%s1 + $0x90] sm:$0xff]
  %v43 = vld [vmem:[%s1 + $0x98] sm:$0xff]
  %v44 = vld [vmem:[%s1 + $0xa0] sm:$0xff]
  %v45 = vld [vmem:[%s1 + $0xa8] sm:$0xff]
  %v46 = vld [vmem:[%s1 + $0xb0] sm:$0xff]
  %v47 = vld [vmem:[%s1 + $0xb8] sm:$0xff]
  %v48 = vld [vmem:[%s1 + $0xc0] sm:$0xff]
  %v49 = vld [vmem:[%s1 + $0xc8] sm:$0xff]
  %v50 = vld [vmem:[%s1 + $0xd0] sm:$0xff]
  %v51 = vld [vmem:[%s1 + $0xd8] sm:$0xff]
  %v52 = vld [vmem:[%s1 + $0xe0] sm:$0xff]
  %v53 = vld [vmem:[%s1 + $0xe8] sm:$0xff]
  %v54 = vld [vmem:[%s1 + $0xf0] sm:$0xff]
  %v55 = vld [vmem:[%s1 + $0xf8] sm:$0xff]
  %v56 = vld [vmem:[%s1 + $0x100] sm:$0xff]
  %v57 = vld [vmem:[%s1 + $0x108] sm:$0xff]
  %v58 = vld [vmem:[%s1 + $0x110] sm:$0xff]
  %v59 = vld [vmem:[%s1 + $0x118] sm:$0xff]
  %v60 = vld [vmem:[%s1 + $0x120] sm:$0xff]
  %v61 = vld [vmem:[%s1 + $0x128] sm:$0xff]
  %v62 = vld [vmem:[%s1 + $0x130] sm:$0xff]
  %v63 = vld [vmem:[%s1 + $0x138] sm:$0xff]
  %v64 = vld [vmem:[%s1 + $0x140] sm:$0xff]
  %v65 = vld [vmem:[%s1 + $0x148] sm:$0xff]
  %v66 = vld [vmem:[%s1 + $0x150] sm:$0xff]
  %v67 = vld [vmem:[%s1 + $0x158] sm:$0xff]
  %v68 = vld [vmem:[%s1 + $0x160] sm:$0xff]
  %v69 = vld [vmem:[%s1 + $0x168] sm:$0xff]
  %v70 = vld [vmem:[%s1 + $0x170] sm:$0xff]
  %v71 = vld [vmem:[%s1 + $0x178] sm:$0xff]
  %v72 = vld [vmem:[%s1 + $0x180] sm:$0xff]
  %v73 = vld [vmem:[%s1 + $0x188] sm:$0xff]
  %v74 = vld [vmem:[%s1 + $0x190] sm:$0xff]
  %v75 = vld [vmem:[%s1 + $0x198] sm:$0xff]
  %v76 = vld [vmem:[%s1 + $0x1a0] sm:$0xff]
  %v77 = vld [vmem:[%s1 + $0x1a8] sm:$0xff]
  %v78 = vld [vmem:[%s1 + $0x1b0] sm:$0xff]
  %v79 = vld [vmem:[%s1 + $0x1b8] sm:$0xff]
  %v80 = vld [vmem:[%s1 + $0x1c0] sm:$0xff]
  %v81 = vld [vmem:[%s1 + $0x1c8] sm:$0xff]
  %v82 = vld [vmem:[%s1 + $0x1d0] sm:$0xff]
  %v83 = vld [vmem:[%s1 + $0x1d8] sm:$0xff]
  %v84 = vld [vmem:[%s1 + $0x1e0] sm:$0xff]
  %v85 = vld [vmem:[%s1 + $0x1e8] sm:$0xff]
  %v86 = vld [vmem:[%s1 + $0x1f0] sm:$0xff]
  %v87 = vld [vmem:[%s1 + $0x1f8] sm:$0xff]
  %88 = vmatprep.subr.mxu0 %v25
  %89 = vmatpush1.msra.mxu0 %v24
  %90 = vmatprep.subr.mxu0 %v27
  %91 = vmatpush1.msra.mxu0 %v26
  %92 = vmatprep.subr.mxu0 %v29
  %93 = vmatpush1.msra.mxu0 %v28
  %94 = vmatprep.subr.mxu0 %v31
  %95 = vmatpush1.msra.mxu0 %v30
  %96 = vmatprep.subr.mxu0 %v33
  %97 = vmatpush1.msra.mxu0 %v32
  %98 = vmatprep.subr.mxu0 %v35
  %99 = vmatpush1.msra.mxu0 %v34
  %100 = vmatprep.subr.mxu0 %v37
  %101 = vmatpush1.msra.mxu0 %v36
  %102 = vmatprep.subr.mxu0 %v39
  %103 = vmatpush1.msra.mxu0 %v38
  %104 = vmatprep.subr.mxu0 %v41
  %105 = vmatpush1.msra.mxu0 %v40
  %106 = vmatprep.subr.mxu0 %v43
  %107 = vmatpush1.msra.mxu0 %v42
  %108 = vmatprep.subr.mxu0 %v45
  %109 = vmatpush1.msra.mxu0 %v44
  %110 = vmatprep.subr.mxu0 %v47
  %111 = vmatpush1.msra.mxu0 %v46
  %112 = vmatprep.subr.mxu0 %v49
  %113 = vmatpush1.msra.mxu0 %v48
  %114 = vmatprep.subr.mxu0 %v51
  %115 = vmatpush1.msra.mxu0 %v50
  %116 = vmatprep.subr.mxu0 %v53
  %117 = vmatpush1.msra.mxu0 %v52
  %118 = vmatprep.subr.mxu0 %v55
  %119 = vmatpush1.msra.mxu0 %v54
  %120 = vmatprep.subr.mxu0 %v57
  %121 = vmatpush1.msra.mxu0 %v56
  %122 = vmatprep.subr.mxu0 %v59
  %123 = vmatpush1.msra.mxu0 %v58
  %124 = vmatprep.subr.mxu0 %v61
  %125 = vmatpush1.msra.mxu0 %v60
  %126 = vmatprep.subr.mxu0 %v63
  %127 = vmatpush1.msra.mxu0 %v62
  %128 = vmatprep.subr.mxu0 %v65
  %129 = vmatpush1.msra.mxu0 %v64
  %130 = vmatprep.subr.mxu0 %v67
  %131 = vmatpush1.msra.mxu0 %v66
  %132 = vmatprep.subr.mxu0 %v69
  %133 = vmatpush1.msra.mxu0 %v68
  %134 = vmatprep.subr.mxu0 %v71
  %135 = vmatpush1.msra.mxu0 %v70
  %136 = vmatprep.subr.mxu0 %v73
  %137 = vmatpush1.msra.mxu0 %v72
  %138 = vmatprep.subr.mxu0 %v75
  %139 = vmatpush1.msra.mxu0 %v74
  %140 = vmatprep.subr.mxu0 %v77
  %141 = vmatpush1.msra.mxu0 %v76
  %142 = vmatprep.subr.mxu0 %v79
  %143 = vmatpush1.msra.mxu0 %v78
  %144 = vmatprep.subr.mxu0 %v81
  %145 = vmatpush1.msra.mxu0 %v80
  %146 = vmatprep.subr.mxu0 %v83
  %147 = vmatpush1.msra.mxu0 %v82
  %148 = vmatprep.subr.mxu0 %v85
  %149 = vmatpush1.msra.mxu0 %v84
  %150 = vmatprep.subr.mxu0 %v87
  %151 = vmatpush1.msra.mxu0 %v86
  %152 = vmatprep.mubr.f32.mxu0 %v21
  %153 = vmatmul.mubr.f32.gmra.mrb[0].mxu0 %v20
  %v154 = vpop.f32.mrb[0].mxu0
  %v155 = vadd.f32 0.0, %v154
  %v156 = vpop.f32.mrb[0].mxu0
  %v157 = vadd.f32 0.0, %v156
  %158 = vdwg.mxu0
  %v159 = vadd.f32 %v22, %v155
  %v160 = vadd.f32 %v23, %v157
  %v161 = vmax.f32 %v159, 0.0
  %v162 = vmax.f32 %v160, 0.0
  %163 = vst [vmem:[#allocation3] sm:$0xff] %v161
  %164 = vst [vmem:[#allocation3 + $0x8] sm:$0xff] %v162
  %s165 = scalar_lea.vmem %s0, 16
  %v166 = vld [vmem:[%s165] sm:$0xff]
  %v167 = vld [vmem:[%s165 + $0x8] sm:$0xff]
  %v168 = vld [vmem:[%s1] sm:$0xff]
  %v169 = vld [vmem:[%s1 + $0x8] sm:$0xff]
  %v170 = vld [vmem:[%s1 + $0x10] sm:$0xff]
  %v171 = vld [vmem:[%s1 + $0x18] sm:$0xff]
  %v172 = vld [vmem:[%s1 + $0x20] sm:$0xff]
  %v173 = vld [vmem:[%s1 + $0x28] sm:$0xff]
  %v174 = vld [vmem:[%s1 + $0x30] sm:$0xff]
  %v175 = vld [vmem:[%s1 + $0x38] sm:$0xff]
  %v176 = vld [vmem:[%s1 + $0x40] sm:$0xff]
  %v177 = vld [vmem:[%s1 + $0x48] sm:$0xff]
  %v178 = vld [vmem:[%s1 + $0x50] sm:$0xff]
  %v179 = vld [vmem:[%s1 + $0x58] sm:$0xff]
  %v180 = vld [vmem:[%s1 + $0x60] sm:$0xff]
  %v181 = vld [vmem:[%s1 + $0x68] sm:$0xff]
  %v182 = vld [vmem:[%s1 + $0x70] sm:$0xff]
  %v183 = vld [vmem:[%s1 + $0x78] sm:$0xff]
  %v184 = vld [vmem:[%s1 + $0x80] sm:$0xff]
  %v185 = vld [vmem:[%s1 + $0x88] sm:$0xff]
  %v186 = vld [vmem:[%s1 + $0x90] sm:$0xff]
  %v187 = vld [vmem:[%s1 + $0x98] sm:$0xff]
  %v188 = vld [vmem:[%s1 + $0xa0] sm:$0xff]
  %v189 = vld [vmem:[%s1 + $0xa8] sm:$0xff]
  %v190 = vld [vmem:[%s1 + $0xb0] sm:$0xff]
  %v191 = vld [vmem:[%s1 + $0xb8] sm:$0xff]
  %v192 = vld [vmem:[%s1 + $0xc0] sm:$0xff]
  %v193 = vld [vmem:[%s1 + $0xc8] sm:$0xff]
  %v194 = vld [vmem:[%s1 + $0xd0] sm:$0xff]
  %v195 = vld [vmem:[%s1 + $0xd8] sm:$0xff]
  %v196 = vld [vmem:[%s1 + $0xe0] sm:$0xff]
  %v197 = vld [vmem:[%s1 + $0xe8] sm:$0xff]
  %v198 = vld [vmem:[%s1 + $0xf0] sm:$0xff]
  %v199 = vld [vmem:[%s1 + $0xf8] sm:$0xff]
  %v200 = vld [vmem:[%s1 + $0x100] sm:$0xff]
  %v201 = vld [vmem:[%s1 + $0x108] sm:$0xff]
  %v202 = vld [vmem:[%s1 + $0x110] sm:$0xff]
  %v203 = vld [vmem:[%s1 + $0x118] sm:$0xff]
  %v204 = vld [vmem:[%s1 + $0x120] sm:$0xff]
  %v205 = vld [vmem:[%s1 + $0x128] sm:$0xff]
  %v206 = vld [vmem:[%s1 + $0x130] sm:$0xff]
  %v207 = vld [vmem:[%s1 + $0x138] sm:$0xff]
  %v208 = vld [vmem:[%s1 + $0x140] sm:$0xff]
  %v209 = vld [vmem:[%s1 + $0x148] sm:$0xff]
  %v210 = vld [vmem:[%s1 + $0x150] sm:$0xff]
  %v211 = vld [vmem:[%s1 + $0x158] sm:$0xff]
  %v212 = vld [vmem:[%s1 + $0x160] sm:$0xff]
  %v213 = vld [vmem:[%s1 + $0x168] sm:$0xff]
  %v214 = vld [vmem:[%s1 + $0x170] sm:$0xff]
  %v215 = vld [vmem:[%s1 + $0x178] sm:$0xff]
  %v216 = vld [vmem:[%s1 + $0x180] sm:$0xff]
  %v217 = vld [vmem:[%s1 + $0x188] sm:$0xff]
  %v218 = vld [vmem:[%s1 + $0x190] sm:$0xff]
  %v219 = vld [vmem:[%s1 + $0x198] sm:$0xff]
  %v220 = vld [vmem:[%s1 + $0x1a0] sm:$0xff]
  %v221 = vld [vmem:[%s1 + $0x1a8] sm:$0xff]
  %v222 = vld [vmem:[%s1 + $0x1b0] sm:$0xff]
  %v223 = vld [vmem:[%s1 + $0x1b8] sm:$0xff]
  %v224 = vld [vmem:[%s1 + $0x1c0] sm:$0xff]
  %v225 = vld [vmem:[%s1 + $0x1c8] sm:$0xff]
  %v226 = vld [vmem:[%s1 + $0x1d0] sm:$0xff]
  %v227 = vld [vmem:[%s1 + $0x1d8] sm:$0xff]
  %v228 = vld [vmem:[%s1 + $0x1e0] sm:$0xff]
  %v229 = vld [vmem:[%s1 + $0x1e8] sm:$0xff]
  %v230 = vld [vmem:[%s1 + $0x1f0] sm:$0xff]
  %v231 = vld [vmem:[%s1 + $0x1f8] sm:$0xff]
  %232 = vmatprep.subr.mxu0 %v169
  %233 = vmatpush1.msra.mxu0 %v168
  %234 = vmatprep.subr.mxu0 %v171
  %235 = vmatpush1.msra.mxu0 %v170
  %236 = vmatprep.subr.mxu0 %v173
  %237 = vmatpush1.msra.mxu0 %v172
  %238 = vmatprep.subr.mxu0 %v175
  %239 = vmatpush1.msra.mxu0 %v174
  %240 = vmatprep.subr.mxu0 %v177
  %241 = vmatpush1.msra.mxu0 %v176
  %242 = vmatprep.subr.mxu0 %v179
  %243 = vmatpush1.msra.mxu0 %v178
  %244 = vmatprep.subr.mxu0 %v181
  %245 = vmatpush1.msra.mxu0 %v180
  %246 = vmatprep.subr.mxu0 %v183
  %247 = vmatpush1.msra.mxu0 %v182
  %248 = vmatprep.subr.mxu0 %v185
  %249 = vmatpush1.msra.mxu0 %v184
  %250 = vmatprep.subr.mxu0 %v187
  %251 = vmatpush1.msra.mxu0 %v186
  %252 = vmatprep.subr.mxu0 %v189
  %253 = vmatpush1.msra.mxu0 %v188
  %254 = vmatprep.subr.mxu0 %v191
  %255 = vmatpush1.msra.mxu0 %v190
  %256 = vmatprep.subr.mxu0 %v193
  %257 = vmatpush1.msra.mxu0 %v192
  %258 = vmatprep.subr.mxu0 %v195
  %259 = vmatpush1.msra.mxu0 %v194
  %260 = vmatprep.subr.mxu0 %v197
  %261 = vmatpush1.msra.mxu0 %v196
  %262 = vmatprep.subr.mxu0 %v199
  %263 = vmatpush1.msra.mxu0 %v198
  %264 = vmatprep.subr.mxu0 %v201
  %265 = vmatpush1.msra.mxu0 %v200
  %266 = vmatprep.subr.mxu0 %v203
  %267 = vmatpush1.msra.mxu0 %v202
  %268 = vmatprep.subr.mxu0 %v205
  %269 = vmatpush1.msra.mxu0 %v204
  %270 = vmatprep.subr.mxu0 %v207
  %271 = vmatpush1.msra.mxu0 %v206
  %272 = vmatprep.subr.mxu0 %v209
  %273 = vmatpush1.msra.mxu0 %v208
  %274 = vmatprep.subr.mxu0 %v211
  %275 = vmatpush1.msra.mxu0 %v210
  %276 = vmatprep.subr.mxu0 %v213
  %277 = vmatpush1.msra.mxu0 %v212
  %278 = vmatprep.subr.mxu0 %v215
  %279 = vmatpush1.msra.mxu0 %v214
  %280 = vmatprep.subr.mxu0 %v217
  %281 = vmatpush1.msra.mxu0 %v216
  %282 = vmatprep.subr.mxu0 %v219
  %283 = vmatpush1.msra.mxu0 %v218
  %284 = vmatprep.subr.mxu0 %v221
  %285 = vmatpush1.msra.mxu0 %v220
  %286 = vmatprep.subr.mxu0 %v223
  %287 = vmatpush1.msra.mxu0 %v222
  %288 = vmatprep.subr.mxu0 %v225
  %289 = vmatpush1.msra.mxu0 %v224
  %290 = vmatprep.subr.mxu0 %v227
  %291 = vmatpush1.msra.mxu0 %v226
  %292 = vmatprep.subr.mxu0 %v229
  %293 = vmatpush1.msra.mxu0 %v228
  %294 = vmatprep.subr.mxu0 %v231
  %295 = vmatpush1.msra.mxu0 %v230
  %296 = vmatprep.mubr.f32.mxu0 %v162
  %297 = vmatmul.mubr.f32.gmra.mrb[0].mxu0 %v161
  %v298 = vpop.f32.mrb[0].mxu0
  %v299 = vadd.f32 0.0, %v298
  %v300 = vpop.f32.mrb[0].mxu0
  %v301 = vadd.f32 0.0, %v300
  %302 = vdwg.mxu0
  %v303 = vadd.f32 %v166, %v299
  %v304 = vadd.f32 %v167, %v301
  %v305 = vmax.f32 %v303, 0.0
  %v306 = vmax.f32 %v304, 0.0
  %s307 = scalar_lea.vmem [#allocation3], 16
  %308 = vst [vmem:[%s307] sm:$0xff] %v305
  %309 = vst [vmem:[%s307 + $0x8] sm:$0xff] %v306
  %s310 = scalar_lea.vmem %s0, 32
  %v311 = vld [vmem:[%s310] sm:$0xff]
  %v312 = vld [vmem:[%s310 + $0x8] sm:$0xff]
  %v313 = vld [vmem:[%s1] sm:$0xff]
  %v314 = vld [vmem:[%s1 + $0x8] sm:$0xff]
  %v315 = vld [vmem:[%s1 + $0x10] sm:$0xff]
  %v316 = vld [vmem:[%s1 + $0x18] sm:$0xff]
  %v317 = vld [vmem:[%s1 + $0x20] sm:$0xff]
  %v318 = vld [vmem:[%s1 + $0x28] sm:$0xff]
  %v319 = vld [vmem:[%s1 + $0x30] sm:$0xff]
  %v320 = vld [vmem:[%s1 + $0x38] sm:$0xff]
  %v321 = vld [vmem:[%s1 + $0x40] sm:$0xff]
  %v322 = vld [vmem:[%s1 + $0x48] sm:$0xff]
  %v323 = vld [vmem:[%s1 + $0x50] sm:$0xff]
  %v324 = vld [vmem:[%s1 + $0x58] sm:$0xff]
  %v325 = vld [vmem:[%s1 + $0x60] sm:$0xff]
  %v326 = vld [vmem:[%s1 + $0x68] sm:$0xff]
  %v327 = vld [vmem:[%s1 + $0x70] sm:$0xff]
  %v328 = vld [vmem:[%s1 + $0x78] sm:$0xff]
  %v329 = vld [vmem:[%s1 + $0x80] sm:$0xff]
  %v330 = vld [vmem:[%s1 + $0x88] sm:$0xff]
  %v331 = vld [vmem:[%s1 + $0x90] sm:$0xff]
  %v332 = vld [vmem:[%s1 + $0x98] sm:$0xff]
  %v333 = vld [vmem:[%s1 + $0xa0] sm:$0xff]
  %v334 = vld [vmem:[%s1 + $0xa8] sm:$0xff]
  %v335 = vld [vmem:[%s1 + $0xb0] sm:$0xff]
  %v336 = vld [vmem:[%s1 + $0xb8] sm:$0xff]
  %v337 = vld [vmem:[%s1 + $0xc0] sm:$0xff]
  %v338 = vld [vmem:[%s1 + $0xc8] sm:$0xff]
  %v339 = vld [vmem:[%s1 + $0xd0] sm:$0xff]
  %v340 = vld [vmem:[%s1 + $0xd8] sm:$0xff]
  %v341 = vld [vmem:[%s1 + $0xe0] sm:$0xff]
  %v342 = vld [vmem:[%s1 + $0xe8] sm:$0xff]
  %v343 = vld [vmem:[%s1 + $0xf0] sm:$0xff]
  %v344 = vld [vmem:[%s1 + $0xf8] sm:$0xff]
  %v345 = vld [vmem:[%s1 + $0x100] sm:$0xff]
  %v346 = vld [vmem:[%s1 + $0x108] sm:$0xff]
  %v347 = vld [vmem:[%s1 + $0x110] sm:$0xff]
  %v348 = vld [vmem:[%s1 + $0x118] sm:$0xff]
  %v349 = vld [vmem:[%s1 + $0x120] sm:$0xff]
  %v350 = vld [vmem:[%s1 + $0x128] sm:$0xff]
  %v351 = vld [vmem:[%s1 + $0x130] sm:$0xff]
  %v352 = vld [vmem:[%s1 + $0x138] sm:$0xff]
  %v353 = vld [vmem:[%s1 + $0x140] sm:$0xff]
  %v354 = vld [vmem:[%s1 + $0x148] sm:$0xff]
  %v355 = vld [vmem:[%s1 + $0x150] sm:$0xff]
  %v356 = vld [vmem:[%s1 + $0x158] sm:$0xff]
  %v357 = vld [vmem:[%s1 + $0x160] sm:$0xff]
  %v358 = vld [vmem:[%s1 + $0x168] sm:$0xff]
  %v359 = vld [vmem:[%s1 + $0x170] sm:$0xff]
  %v360 = vld [vmem:[%s1 + $0x178] sm:$0xff]
  %v361 = vld [vmem:[%s1 + $0x180] sm:$0xff]
  %v362 = vld [vmem:[%s1 + $0x188] sm:$0xff]
  %v363 = vld [vmem:[%s1 + $0x190] sm:$0xff]
  %v364 = vld [vmem:[%s1 + $0x198] sm:$0xff]
  %v365 = vld [vmem:[%s1 + $0x1a0] sm:$0xff]
  %v366 = vld [vmem:[%s1 + $0x1a8] sm:$0xff]
  %v367 = vld [vmem:[%s1 + $0x1b0] sm:$0xff]
  %v368 = vld [vmem:[%s1 + $0x1b8] sm:$0xff]
  %v369 = vld [vmem:[%s1 + $0x1c0] sm:$0xff]
  %v370 = vld [vmem:[%s1 + $0x1c8] sm:$0xff]
  %v371 = vld [vmem:[%s1 + $0x1d0] sm:$0xff]
  %v372 = vld [vmem:[%s1 + $0x1d8] sm:$0xff]
  %v373 = vld [vmem:[%s1 + $0x1e0] sm:$0xff]
  %v374 = vld [vmem:[%s1 + $0x1e8] sm:$0xff]
  %v375 = vld [vmem:[%s1 + $0x1f0] sm:$0xff]
  %v376 = vld [vmem:[%s1 + $0x1f8] sm:$0xff]
  %377 = vmatprep.subr.mxu0 %v314
  %378 = vmatpush1.msra.mxu0 %v313
  %379 = vmatprep.subr.mxu0 %v316
  %380 = vmatpush1.msra.mxu0 %v315
  %381 = vmatprep.subr.mxu0 %v318
  %382 = vmatpush1.msra.mxu0 %v317
  %383 = vmatprep.subr.mxu0 %v320
  %384 = vmatpush1.msra.mxu0 %v319
  %385 = vmatprep.subr.mxu0 %v322
  %386 = vmatpush1.msra.mxu0 %v321
  %387 = vmatprep.subr.mxu0 %v324
  %388 = vmatpush1.msra.mxu0 %v323
  %389 = vmatprep.subr.mxu0 %v326
  %390 = vmatpush1.msra.mxu0 %v325
  %391 = vmatprep.subr.mxu0 %v328
  %392 = vmatpush1.msra.mxu0 %v327
  %393 = vmatprep.subr.mxu0 %v330
  %394 = vmatpush1.msra.mxu0 %v329
  %395 = vmatprep.subr.mxu0 %v332
  %396 = vmatpush1.msra.mxu0 %v331
  %397 = vmatprep.subr.mxu0 %v334
  %398 = vmatpush1.msra.mxu0 %v333
  %399 = vmatprep.subr.mxu0 %v336
  %400 = vmatpush1.msra.mxu0 %v335
  %401 = vmatprep.subr.mxu0 %v338
  %402 = vmatpush1.msra.mxu0 %v337
  %403 = vmatprep.subr.mxu0 %v340
  %404 = vmatpush1.msra.mxu0 %v339
  %405 = vmatprep.subr.mxu0 %v342
  %406 = vmatpush1.msra.mxu0 %v341
  %407 = vmatprep.subr.mxu0 %v344
  %408 = vmatpush1.msra.mxu0 %v343
  %409 = vmatprep.subr.mxu0 %v346
  %410 = vmatpush1.msra.mxu0 %v345
  %411 = vmatprep.subr.mxu0 %v348
  %412 = vmatpush1.msra.mxu0 %v347
  %413 = vmatprep.subr.mxu0 %v350
  %414 = vmatpush1.msra.mxu0 %v349
  %415 = vmatprep.subr.mxu0 %v352
  %416 = vmatpush1.msra.mxu0 %v351
  %417 = vmatprep.subr.mxu0 %v354
  %418 = vmatpush1.msra.mxu0 %v353
  %419 = vmatprep.subr.mxu0 %v356
  %420 = vmatpush1.msra.mxu0 %v355
  %421 = vmatprep.subr.mxu0 %v358
  %422 = vmatpush1.msra.mxu0 %v357
  %423 = vmatprep.subr.mxu0 %v360
  %424 = vmatpush1.msra.mxu0 %v359
  %425 = vmatprep.subr.mxu0 %v362
  %426 = vmatpush1.msra.mxu0 %v361
  %427 = vmatprep.subr.mxu0 %v364
  %428 = vmatpush1.msra.mxu0 %v363
  %429 = vmatprep.subr.mxu0 %v366
  %430 = vmatpush1.msra.mxu0 %v365
  %431 = vmatprep.subr.mxu0 %v368
  %432 = vmatpush1.msra.mxu0 %v367
  %433 = vmatprep.subr.mxu0 %v370
  %434 = vmatpush1.msra.mxu0 %v369
  %435 = vmatprep.subr.mxu0 %v372
  %436 = vmatpush1.msra.mxu0 %v371
  %437 = vmatprep.subr.mxu0 %v374
  %438 = vmatpush1.msra.mxu0 %v373
  %439 = vmatprep.subr.mxu0 %v376
  %440 = vmatpush1.msra.mxu0 %v375
  %441 = vmatprep.mubr.f32.mxu0 %v306
  %442 = vmatmul.mubr.f32.gmra.mrb[0].mxu0 %v305
  %v443 = vpop.f32.mrb[0].mxu0
  %v444 = vadd.f32 0.0, %v443
  %v445 = vpop.f32.mrb[0].mxu0
  %v446 = vadd.f32 0.0, %v445
  %447 = vdwg.mxu0
  %v448 = vadd.f32 %v311, %v444
  %v449 = vadd.f32 %v312, %v446
  %v450 = vmax.f32 %v448, 0.0
  %v451 = vmax.f32 %v449, 0.0
  %s452 = scalar_lea.vmem [#allocation3], 32
  %453 = vst [vmem:[%s452] sm:$0xff] %v450
  %454 = vst [vmem:[%s452 + $0x8] sm:$0xff] %v451
  %s455 = scalar_lea.vmem %s0, 48
  %v456 = vld [vmem:[%s455] sm:$0xff]
  %v457 = vld [vmem:[%s455 + $0x8] sm:$0xff]
  %v458 = vld [vmem:[%s1] sm:$0xff]
  %v459 = vld [vmem:[%s1 + $0x8] sm:$0xff]
  %v460 = vld [vmem:[%s1 + $0x10] sm:$0xff]
  %v461 = vld [vmem:[%s1 + $0x18] sm:$0xff]
  %v462 = vld [vmem:[%s1 + $0x20] sm:$0xff]
  %v463 = vld [vmem:[%s1 + $0x28] sm:$0xff]
  %v464 = vld [vmem:[%s1 + $0x30] sm:$0xff]
  %v465 = vld [vmem:[%s1 + $0x38] sm:$0xff]
  %v466 = vld [vmem:[%s1 + $0x40] sm:$0xff]
  %v467 = vld [vmem:[%s1 + $0x48] sm:$0xff]
  %v468 = vld [vmem:[%s1 + $0x50] sm:$0xff]
  %v469 = vld [vmem:[%s1 + $0x58] sm:$0xff]
  %v470 = vld [vmem:[%s1 + $0x60] sm:$0xff]
  %v471 = vld [vmem:[%s1 + $0x68] sm:$0xff]
  %v472 = vld [vmem:[%s1 + $0x70] sm:$0xff]
  %v473 = vld [vmem:[%s1 + $0x78] sm:$0xff]
  %v474 = vld [vmem:[%s1 + $0x80] sm:$0xff]
  %v475 = vld [vmem:[%s1 + $0x88] sm:$0xff]
  %v476 = vld [vmem:[%s1 + $0x90] sm:$0xff]
  %v477 = vld [vmem:[%s1 + $0x98] sm:$0xff]
  %v478 = vld [vmem:[%s1 + $0xa0] sm:$0xff]
  %v479 = vld [vmem:[%s1 + $0xa8] sm:$0xff]
  %v480 = vld [vmem:[%s1 + $0xb0] sm:$0xff]
  %v481 = vld [vmem:[%s1 + $0xb8] sm:$0xff]
  %v482 = vld [vmem:[%s1 + $0xc0] sm:$0xff]
  %v483 = vld [vmem:[%s1 + $0xc8] sm:$0xff]
  %v484 = vld [vmem:[%s1 + $0xd0] sm:$0xff]
  %v485 = vld [vmem:[%s1 + $0xd8] sm:$0xff]
  %v486 = vld [vmem:[%s1 + $0xe0] sm:$0xff]
  %v487 = vld [vmem:[%s1 + $0xe8] sm:$0xff]
  %v488 = vld [vmem:[%s1 + $0xf0] sm:$0xff]
  %v489 = vld [vmem:[%s1 + $0xf8] sm:$0xff]
  %v490 = vld [vmem:[%s1 + $0x100] sm:$0xff]
  %v491 = vld [vmem:[%s1 + $0x108] sm:$0xff]
  %v492 = vld [vmem:[%s1 + $0x110] sm:$0xff]
  %v493 = vld [vmem:[%s1 + $0x118] sm:$0xff]
  %v494 = vld [vmem:[%s1 + $0x120] sm:$0xff]
  %v495 = vld [vmem:[%s1 + $0x128] sm:$0xff]
  %v496 = vld [vmem:[%s1 + $0x130] sm:$0xff]
  %v497 = vld [vmem:[%s1 + $0x138] sm:$0xff]
  %v498 = vld [vmem:[%s1 + $0x140] sm:$0xff]
  %v499 = vld [vmem:[%s1 + $0x148] sm:$0xff]
  %v500 = vld [vmem:[%s1 + $0x150] sm:$0xff]
  %v501 = vld [vmem:[%s1 + $0x158] sm:$0xff]
  %v502 = vld [vmem:[%s1 + $0x160] sm:$0xff]
  %v503 = vld [vmem:[%s1 + $0x168] sm:$0xff]
  %v504 = vld [vmem:[%s1 + $0x170] sm:$0xff]
  %v505 = vld [vmem:[%s1 + $0x178] sm:$0xff]
  %v506 = vld [vmem:[%s1 + $0x180] sm:$0xff]
  %v507 = vld [vmem:[%s1 + $0x188] sm:$0xff]
  %v508 = vld [vmem:[%s1 + $0x190] sm:$0xff]
  %v509 = vld [vmem:[%s1 + $0x198] sm:$0xff]
  %v510 = vld [vmem:[%s1 + $0x1a0] sm:$0xff]
  %v511 = vld [vmem:[%s1 + $0x1a8] sm:$0xff]
  %v512 = vld [vmem:[%s1 + $0x1b0] sm:$0xff]
  %v513 = vld [vmem:[%s1 + $0x1b8] sm:$0xff]
  %v514 = vld [vmem:[%s1 + $0x1c0] sm:$0xff]
  %v515 = vld [vmem:[%s1 + $0x1c8] sm:$0xff]
  %v516 = vld [vmem:[%s1 + $0x1d0] sm:$0xff]
  %v517 = vld [vmem:[%s1 + $0x1d8] sm:$0xff]
  %v518 = vld [vmem:[%s1 + $0x1e0] sm:$0xff]
  %v519 = vld [vmem:[%s1 + $0x1e8] sm:$0xff]
  %v520 = vld [vmem:[%s1 + $0x1f0] sm:$0xff]
  %v521 = vld [vmem:[%s1 + $0x1f8] sm:$0xff]
  %522 = vmatprep.subr.mxu0 %v459
  %523 = vmatpush1.msra.mxu0 %v458
  %524 = vmatprep.subr.mxu0 %v461
  %525 = vmatpush1.msra.mxu0 %v460
  %526 = vmatprep.subr.mxu0 %v463
  %527 = vmatpush1.msra.mxu0 %v462
  %528 = vmatprep.subr.mxu0 %v465
  %529 = vmatpush1.msra.mxu0 %v464
  %530 = vmatprep.subr.mxu0 %v467
  %531 = vmatpush1.msra.mxu0 %v466
  %532 = vmatprep.subr.mxu0 %v469
  %533 = vmatpush1.msra.mxu0 %v468
  %534 = vmatprep.subr.mxu0 %v471
  %535 = vmatpush1.msra.mxu0 %v470
  %536 = vmatprep.subr.mxu0 %v473
  %537 = vmatpush1.msra.mxu0 %v472
  %538 = vmatprep.subr.mxu0 %v475
  %539 = vmatpush1.msra.mxu0 %v474
  %540 = vmatprep.subr.mxu0 %v477
  %541 = vmatpush1.msra.mxu0 %v476
  %542 = vmatprep.subr.mxu0 %v479
  %543 = vmatpush1.msra.mxu0 %v478
  %544 = vmatprep.subr.mxu0 %v481
  %545 = vmatpush1.msra.mxu0 %v480
  %546 = vmatprep.subr.mxu0 %v483
  %547 = vmatpush1.msra.mxu0 %v482
  %548 = vmatprep.subr.mxu0 %v485
  %549 = vmatpush1.msra.mxu0 %v484
  %550 = vmatprep.subr.mxu0 %v487
  %551 = vmatpush1.msra.mxu0 %v486
  %552 = vmatprep.subr.mxu0 %v489
  %553 = vmatpush1.msra.mxu0 %v488
  %554 = vmatprep.subr.mxu0 %v491
  %555 = vmatpush1.msra.mxu0 %v490
  %556 = vmatprep.subr.mxu0 %v493
  %557 = vmatpush1.msra.mxu0 %v492
  %558 = vmatprep.subr.mxu0 %v495
  %559 = vmatpush1.msra.mxu0 %v494
  %560 = vmatprep.subr.mxu0 %v497
  %561 = vmatpush1.msra.mxu0 %v496
  %562 = vmatprep.subr.mxu0 %v499
  %563 = vmatpush1.msra.mxu0 %v498
  %564 = vmatprep.subr.mxu0 %v501
  %565 = vmatpush1.msra.mxu0 %v500
  %566 = vmatprep.subr.mxu0 %v503
  %567 = vmatpush1.msra.mxu0 %v502
  %568 = vmatprep.subr.mxu0 %v505
  %569 = vmatpush1.msra.mxu0 %v504
  %570 = vmatprep.subr.mxu0 %v507
  %571 = vmatpush1.msra.mxu0 %v506
  %572 = vmatprep.subr.mxu0 %v509
  %573 = vmatpush1.msra.mxu0 %v508
  %574 = vmatprep.subr.mxu0 %v511
  %575 = vmatpush1.msra.mxu0 %v510
  %576 = vmatprep.subr.mxu0 %v513
  %577 = vmatpush1.msra.mxu0 %v512
  %578 = vmatprep.subr.mxu0 %v515
  %579 = vmatpush1.msra.mxu0 %v514
  %580 = vmatprep.subr.mxu0 %v517
  %581 = vmatpush1.msra.mxu0 %v516
  %582 = vmatprep.subr.mxu0 %v519
  %583 = vmatpush1.msra.mxu0 %v518
  %584 = vmatprep.subr.mxu0 %v521
  %585 = vmatpush1.msra.mxu0 %v520
  %586 = vmatprep.mubr.f32.mxu0 %v451
  %587 = vmatmul.mubr.f32.gmra.mrb[0].mxu0 %v450
  %v588 = vpop.f32.mrb[0].mxu0
  %v589 = vadd.f32 0.0, %v588
  %v590 = vpop.f32.mrb[0].mxu0
  %v591 = vadd.f32 0.0, %v590
  %592 = vdwg.mxu0
  %v593 = vadd.f32 %v456, %v589
  %v594 = vadd.f32 %v457, %v591
  %v595 = vmax.f32 %v593, 0.0
  %v596 = vmax.f32 %v594, 0.0
  %s597 = scalar_lea.vmem [#allocation3], 48
  %598 = vst [vmem:[%s597] sm:$0xff] %v595
  %599 = vst [vmem:[%s597 + $0x8] sm:$0xff] %v596
  %s600 = scalar_lea.vmem %s0, 64
  %v601 = vld [vmem:[%s600] sm:$0xff]
  %v602 = vld [vmem:[%s600 + $0x8] sm:$0xff]
  %v603 = vld [vmem:[%s1] sm:$0xff]
  %v604 = vld [vmem:[%s1 + $0x8] sm:$0xff]
  %v605 = vld [vmem:[%s1 + $0x10] sm:$0xff]
  %v606 = vld [vmem:[%s1 + $0x18] sm:$0xff]
  %v607 = vld [vmem:[%s1 + $0x20] sm:$0xff]
  %v608 = vld [vmem:[%s1 + $0x28] sm:$0xff]
  %v609 = vld [vmem:[%s1 + $0x30] sm:$0xff]
  %v610 = vld [vmem:[%s1 + $0x38] sm:$0xff]
  %v611 = vld [vmem:[%s1 + $0x40] sm:$0xff]
  %v612 = vld [vmem:[%s1 + $0x48] sm:$0xff]
  %v613 = vld [vmem:[%s1 + $0x50] sm:$0xff]
  %v614 = vld [vmem:[%s1 + $0x58] sm:$0xff]
  %v615 = vld [vmem:[%s1 + $0x60] sm:$0xff]
  %v616 = vld [vmem:[%s1 + $0x68] sm:$0xff]
  %v617 = vld [vmem:[%s1 + $0x70] sm:$0xff]
  %v618 = vld [vmem:[%s1 + $0x78] sm:$0xff]
  %v619 = vld [vmem:[%s1 + $0x80] sm:$0xff]
  %v620 = vld [vmem:[%s1 + $0x88] sm:$0xff]
  %v621 = vld [vmem:[%s1 + $0x90] sm:$0xff]
  %v622 = vld [vmem:[%s1 + $0x98] sm:$0xff]
  %v623 = vld [vmem:[%s1 + $0xa0] sm:$0xff]
  %v624 = vld [vmem:[%s1 + $0xa8] sm:$0xff]
  %v625 = vld [vmem:[%s1 + $0xb0] sm:$0xff]
  %v626 = vld [vmem:[%s1 + $0xb8] sm:$0xff]
  %v627 = vld [vmem:[%s1 + $0xc0] sm:$0xff]
  %v628 = vld [vmem:[%s1 + $0xc8] sm:$0xff]
  %v629 = vld [vmem:[%s1 + $0xd0] sm:$0xff]
  %v630 = vld [vmem:[%s1 + $0xd8] sm:$0xff]
  %v631 = vld [vmem:[%s1 + $0xe0] sm:$0xff]
  %v632 = vld [vmem:[%s1 + $0xe8] sm:$0xff]
  %v633 = vld [vmem:[%s1 + $0xf0] sm:$0xff]
  %v634 = vld [vmem:[%s1 + $0xf8] sm:$0xff]
  %v635 = vld [vmem:[%s1 + $0x100] sm:$0xff]
  %v636 = vld [vmem:[%s1 + $0x108] sm:$0xff]
  %v637 = vld [vmem:[%s1 + $0x110] sm:$0xff]
  %v638 = vld [vmem:[%s1 + $0x118] sm:$0xff]
  %v639 = vld [vmem:[%s1 + $0x120] sm:$0xff]
  %v640 = vld [vmem:[%s1 + $0x128] sm:$0xff]
  %v641 = vld [vmem:[%s1 + $0x130] sm:$0xff]
  %v642 = vld [vmem:[%s1 + $0x138] sm:$0xff]
  %v643 = vld [vmem:[%s1 + $0x140] sm:$0xff]
  %v644 = vld [vmem:[%s1 + $0x148] sm:$0xff]
  %v645 = vld [vmem:[%s1 + $0x150] sm:$0xff]
  %v646 = vld [vmem:[%s1 + $0x158] sm:$0xff]
  %v647 = vld [vmem:[%s1 + $0x160] sm:$0xff]
  %v648 = vld [vmem:[%s1 + $0x168] sm:$0xff]
  %v649 = vld [vmem:[%s1 + $0x170] sm:$0xff]
  %v650 = vld [vmem:[%s1 + $0x178] sm:$0xff]
  %v651 = vld [vmem:[%s1 + $0x180] sm:$0xff]
  %v652 = vld [vmem:[%s1 + $0x188] sm:$0xff]
  %v653 = vld [vmem:[%s1 + $0x190] sm:$0xff]
  %v654 = vld [vmem:[%s1 + $0x198] sm:$0xff]
  %v655 = vld [vmem:[%s1 + $0x1a0] sm:$0xff]
  %v656 = vld [vmem:[%s1 + $0x1a8] sm:$0xff]
  %v657 = vld [vmem:[%s1 + $0x1b0] sm:$0xff]
  %v658 = vld [vmem:[%s1 + $0x1b8] sm:$0xff]
  %v659 = vld [vmem:[%s1 + $0x1c0] sm:$0xff]
  %v660 = vld [vmem:[%s1 + $0x1c8] sm:$0xff]
  %v661 = vld [vmem:[%s1 + $0x1d0] sm:$0xff]
  %v662 = vld [vmem:[%s1 + $0x1d8] sm:$0xff]
  %v663 = vld [vmem:[%s1 + $0x1e0] sm:$0xff]
  %v664 = vld [vmem:[%s1 + $0x1e8] sm:$0xff]
  %v665 = vld [vmem:[%s1 + $0x1f0] sm:$0xff]
  %v666 = vld [vmem:[%s1 + $0x1f8] sm:$0xff]
  %667 = vmatprep.subr.mxu0 %v604
  %668 = vmatpush1.msra.mxu0 %v603
  %669 = vmatprep.subr.mxu0 %v606
  %670 = vmatpush1.msra.mxu0 %v605
  %671 = vmatprep.subr.mxu0 %v608
  %672 = vmatpush1.msra.mxu0 %v607
  %673 = vmatprep.subr.mxu0 %v610
  %674 = vmatpush1.msra.mxu0 %v609
  %675 = vmatprep.subr.mxu0 %v612
  %676 = vmatpush1.msra.mxu0 %v611
  %677 = vmatprep.subr.mxu0 %v614
  %678 = vmatpush1.msra.mxu0 %v613
  %679 = vmatprep.subr.mxu0 %v616
  %680 = vmatpush1.msra.mxu0 %v615
  %681 = vmatprep.subr.mxu0 %v618
  %682 = vmatpush1.msra.mxu0 %v617
  %683 = vmatprep.subr.mxu0 %v620
  %684 = vmatpush1.msra.mxu0 %v619
  %685 = vmatprep.subr.mxu0 %v622
  %686 = vmatpush1.msra.mxu0 %v621
  %687 = vmatprep.subr.mxu0 %v624
  %688 = vmatpush1.msra.mxu0 %v623
  %689 = vmatprep.subr.mxu0 %v626
  %690 = vmatpush1.msra.mxu0 %v625
  %691 = vmatprep.subr.mxu0 %v628
  %692 = vmatpush1.msra.mxu0 %v627
  %693 = vmatprep.subr.mxu0 %v630
  %694 = vmatpush1.msra.mxu0 %v629
  %695 = vmatprep.subr.mxu0 %v632
  %696 = vmatpush1.msra.mxu0 %v631
  %697 = vmatprep.subr.mxu0 %v634
  %698 = vmatpush1.msra.mxu0 %v633
  %699 = vmatprep.subr.mxu0 %v636
  %700 = vmatpush1.msra.mxu0 %v635
  %701 = vmatprep.subr.mxu0 %v638
  %702 = vmatpush1.msra.mxu0 %v637
  %703 = vmatprep.subr.mxu0 %v640
  %704 = vmatpush1.msra.mxu0 %v639
  %705 = vmatprep.subr.mxu0 %v642
  %706 = vmatpush1.msra.mxu0 %v641
  %707 = vmatprep.subr.mxu0 %v644
  %708 = vmatpush1.msra.mxu0 %v643
  %709 = vmatprep.subr.mxu0 %v646
  %710 = vmatpush1.msra.mxu0 %v645
  %711 = vmatprep.subr.mxu0 %v648
  %712 = vmatpush1.msra.mxu0 %v647
  %713 = vmatprep.subr.mxu0 %v650
  %714 = vmatpush1.msra.mxu0 %v649
  %715 = vmatprep.subr.mxu0 %v652
  %716 = vmatpush1.msra.mxu0 %v651
  %717 = vmatprep.subr.mxu0 %v654
  %718 = vmatpush1.msra.mxu0 %v653
  %719 = vmatprep.subr.mxu0 %v656
  %720 = vmatpush1.msra.mxu0 %v655
  %721 = vmatprep.subr.mxu0 %v658
  %722 = vmatpush1.msra.mxu0 %v657
  %723 = vmatprep.subr.mxu0 %v660
  %724 = vmatpush1.msra.mxu0 %v659
  %725 = vmatprep.subr.mxu0 %v662
  %726 = vmatpush1.msra.mxu0 %v661
  %727 = vmatprep.subr.mxu0 %v664
  %728 = vmatpush1.msra.mxu0 %v663
  %729 = vmatprep.subr.mxu0 %v666
  %730 = vmatpush1.msra.mxu0 %v665
  %731 = vmatprep.mubr.f32.mxu0 %v596
  %732 = vmatmul.mubr.f32.gmra.mrb[0].mxu0 %v595
  %v733 = vpop.f32.mrb[0].mxu0
  %v734 = vadd.f32 0.0, %v733
  %v735 = vpop.f32.mrb[0].mxu0
  %v736 = vadd.f32 0.0, %v735
  %737 = vdwg.mxu0
  %v738 = vadd.f32 %v601, %v734
  %v739 = vadd.f32 %v602, %v736
  %v740 = vmax.f32 %v738, 0.0
  %v741 = vmax.f32 %v739, 0.0
  %s742 = scalar_lea.vmem [#allocation3], 64
  %743 = vst [vmem:[%s742] sm:$0xff] %v740
  %744 = vst [vmem:[%s742 + $0x8] sm:$0xff] %v741
  %s745 = scalar_lea.vmem %s0, 80
  %v746 = vld [vmem:[%s745] sm:$0xff]
  %v747 = vld [vmem:[%s745 + $0x8] sm:$0xff]
  %v748 = vld [vmem:[%s1] sm:$0xff]
  %v749 = vld [vmem:[%s1 + $0x8] sm:$0xff]
  %v750 = vld [vmem:[%s1 + $0x10] sm:$0xff]
  %v751 = vld [vmem:[%s1 + $0x18] sm:$0xff]
  %v752 = vld [vmem:[%s1 + $0x20] sm:$0xff]
  %v753 = vld [vmem:[%s1 + $0x28] sm:$0xff]
  %v754 = vld [vmem:[%s1 + $0x30] sm:$0xff]
  %v755 = vld [vmem:[%s1 + $0x38] sm:$0xff]
  %v756 = vld [vmem:[%s1 + $0x40] sm:$0xff]
  %v757 = vld [vmem:[%s1 + $0x48] sm:$0xff]
  %v758 = vld [vmem:[%s1 + $0x50] sm:$0xff]
  %v759 = vld [vmem:[%s1 + $0x58] sm:$0xff]
  %v760 = vld [vmem:[%s1 + $0x60] sm:$0xff]
  %v761 = vld [vmem:[%s1 + $0x68] sm:$0xff]
  %v762 = vld [vmem:[%s1 + $0x70] sm:$0xff]
  %v763 = vld [vmem:[%s1 + $0x78] sm:$0xff]
  %v764 = vld [vmem:[%s1 + $0x80] sm:$0xff]
  %v765 = vld [vmem:[%s1 + $0x88] sm:$0xff]
  %v766 = vld [vmem:[%s1 + $0x90] sm:$0xff]
  %v767 = vld [vmem:[%s1 + $0x98] sm:$0xff]
  %v768 = vld [vmem:[%s1 + $0xa0] sm:$0xff]
  %v769 = vld [vmem:[%s1 + $0xa8] sm:$0xff]
  %v770 = vld [vmem:[%s1 + $0xb0] sm:$0xff]
  %v771 = vld [vmem:[%s1 + $0xb8] sm:$0xff]
  %v772 = vld [vmem:[%s1 + $0xc0] sm:$0xff]
  %v773 = vld [vmem:[%s1 + $0xc8] sm:$0xff]
  %v774 = vld [vmem:[%s1 + $0xd0] sm:$0xff]
  %v775 = vld [vmem:[%s1 + $0xd8] sm:$0xff]
  %v776 = vld [vmem:[%s1 + $0xe0] sm:$0xff]
  %v777 = vld [vmem:[%s1 + $0xe8] sm:$0xff]
  %v778 = vld [vmem:[%s1 + $0xf0] sm:$0xff]
  %v779 = vld [vmem:[%s1 + $0xf8] sm:$0xff]
  %v780 = vld [vmem:[%s1 + $0x100] sm:$0xff]
  %v781 = vld [vmem:[%s1 + $0x108] sm:$0xff]
  %v782 = vld [vmem:[%s1 + $0x110] sm:$0xff]
  %v783 = vld [vmem:[%s1 + $0x118] sm:$0xff]
  %v784 = vld [vmem:[%s1 + $0x120] sm:$0xff]
  %v785 = vld [vmem:[%s1 + $0x128] sm:$0xff]
  %v786 = vld [vmem:[%s1 + $0x130] sm:$0xff]
  %v787 = vld [vmem:[%s1 + $0x138] sm:$0xff]
  %v788 = vld [vmem:[%s1 + $0x140] sm:$0xff]
  %v789 = vld [vmem:[%s1 + $0x148] sm:$0xff]
  %v790 = vld [vmem:[%s1 + $0x150] sm:$0xff]
  %v791 = vld [vmem:[%s1 + $0x158] sm:$0xff]
  %v792 = vld [vmem:[%s1 + $0x160] sm:$0xff]
  %v793 = vld [vmem:[%s1 + $0x168] sm:$0xff]
  %v794 = vld [vmem:[%s1 + $0x170] sm:$0xff]
  %v795 = vld [vmem:[%s1 + $0x178] sm:$0xff]
  %v796 = vld [vmem:[%s1 + $0x180] sm:$0xff]
  %v797 = vld [vmem:[%s1 + $0x188] sm:$0xff]
  %v798 = vld [vmem:[%s1 + $0x190] sm:$0xff]
  %v799 = vld [vmem:[%s1 + $0x198] sm:$0xff]
  %v800 = vld [vmem:[%s1 + $0x1a0] sm:$0xff]
  %v801 = vld [vmem:[%s1 + $0x1a8] sm:$0xff]
  %v802 = vld [vmem:[%s1 + $0x1b0] sm:$0xff]
  %v803 = vld [vmem:[%s1 + $0x1b8] sm:$0xff]
  %v804 = vld [vmem:[%s1 + $0x1c0] sm:$0xff]
  %v805 = vld [vmem:[%s1 + $0x1c8] sm:$0xff]
  %v806 = vld [vmem:[%s1 + $0x1d0] sm:$0xff]
  %v807 = vld [vmem:[%s1 + $0x1d8] sm:$0xff]
  %v808 = vld [vmem:[%s1 + $0x1e0] sm:$0xff]
  %v809 = vld [vmem:[%s1 + $0x1e8] sm:$0xff]
  %v810 = vld [vmem:[%s1 + $0x1f0] sm:$0xff]
  %v811 = vld [vmem:[%s1 + $0x1f8] sm:$0xff]
  %812 = vmatprep.subr.mxu0 %v749
  %813 = vmatpush1.msra.mxu0 %v748
  %814 = vmatprep.subr.mxu0 %v751
  %815 = vmatpush1.msra.mxu0 %v750
  %816 = vmatprep.subr.mxu0 %v753
  %817 = vmatpush1.msra.mxu0 %v752
  %818 = vmatprep.subr.mxu0 %v755
  %819 = vmatpush1.msra.mxu0 %v754
  %820 = vmatprep.subr.mxu0 %v757
  %821 = vmatpush1.msra.mxu0 %v756
  %822 = vmatprep.subr.mxu0 %v759
  %823 = vmatpush1.msra.mxu0 %v758
  %824 = vmatprep.subr.mxu0 %v761
  %825 = vmatpush1.msra.mxu0 %v760
  %826 = vmatprep.subr.mxu0 %v763
  %827 = vmatpush1.msra.mxu0 %v762
  %828 = vmatprep.subr.mxu0 %v765
  %829 = vmatpush1.msra.mxu0 %v764
  %830 = vmatprep.subr.mxu0 %v767
  %831 = vmatpush1.msra.mxu0 %v766
  %832 = vmatprep.subr.mxu0 %v769
  %833 = vmatpush1.msra.mxu0 %v768
  %834 = vmatprep.subr.mxu0 %v771
  %835 = vmatpush1.msra.mxu0 %v770
  %836 = vmatprep.subr.mxu0 %v773
  %837 = vmatpush1.msra.mxu0 %v772
  %838 = vmatprep.subr.mxu0 %v775
  %839 = vmatpush1.msra.mxu0 %v774
  %840 = vmatprep.subr.mxu0 %v777
  %841 = vmatpush1.msra.mxu0 %v776
  %842 = vmatprep.subr.mxu0 %v779
  %843 = vmatpush1.msra.mxu0 %v778
  %844 = vmatprep.subr.mxu0 %v781
  %845 = vmatpush1.msra.mxu0 %v780
  %846 = vmatprep.subr.mxu0 %v783
  %847 = vmatpush1.msra.mxu0 %v782
  %848 = vmatprep.subr.mxu0 %v785
  %849 = vmatpush1.msra.mxu0 %v784
  %850 = vmatprep.subr.mxu0 %v787
  %851 = vmatpush1.msra.mxu0 %v786
  %852 = vmatprep.subr.mxu0 %v789
  %853 = vmatpush1.msra.mxu0 %v788
  %854 = vmatprep.subr.mxu0 %v791
  %855 = vmatpush1.msra.mxu0 %v790
  %856 = vmatprep.subr.mxu0 %v793
  %857 = vmatpush1.msra.mxu0 %v792
  %858 = vmatprep.subr.mxu0 %v795
  %859 = vmatpush1.msra.mxu0 %v794
  %860 = vmatprep.subr.mxu0 %v797
  %861 = vmatpush1.msra.mxu0 %v796
  %862 = vmatprep.subr.mxu0 %v799
  %863 = vmatpush1.msra.mxu0 %v798
  %864 = vmatprep.subr.mxu0 %v801
  %865 = vmatpush1.msra.mxu0 %v800
  %866 = vmatprep.subr.mxu0 %v803
  %867 = vmatpush1.msra.mxu0 %v802
  %868 = vmatprep.subr.mxu0 %v805
  %869 = vmatpush1.msra.mxu0 %v804
  %870 = vmatprep.subr.mxu0 %v807
  %871 = vmatpush1.msra.mxu0 %v806
  %872 = vmatprep.subr.mxu0 %v809
  %873 = vmatpush1.msra.mxu0 %v808
  %874 = vmatprep.subr.mxu0 %v811
  %875 = vmatpush1.msra.mxu0 %v810
  %876 = vmatprep.mubr.f32.mxu0 %v741
  %877 = vmatmul.mubr.f32.gmra.mrb[0].mxu0 %v740
  %v878 = vpop.f32.mrb[0].mxu0
  %v879 = vadd.f32 0.0, %v878
  %v880 = vpop.f32.mrb[0].mxu0
  %v881 = vadd.f32 0.0, %v880
  %882 = vdwg.mxu0
  %v883 = vadd.f32 %v746, %v879
  %v884 = vadd.f32 %v747, %v881
  %v885 = vmax.f32 %v883, 0.0
  %v886 = vmax.f32 %v884, 0.0
  %s887 = scalar_lea.vmem [#allocation3], 80
  %888 = vst [vmem:[%s887] sm:$0xff] %v885
  %889 = vst [vmem:[%s887 + $0x8] sm:$0xff] %v886
  %s890 = scalar_lea.vmem %s0, 96
  %v891 = vld [vmem:[%s890] sm:$0xff]
  %v892 = vld [vmem:[%s890 + $0x8] sm:$0xff]
  %v893 = vld [vmem:[%s1] sm:$0xff]
  %v894 = vld [vmem:[%s1 + $0x8] sm:$0xff]
  %v895 = vld [vmem:[%s1 + $0x10] sm:$0xff]
  %v896 = vld [vmem:[%s1 + $0x18] sm:$0xff]
  %v897 = vld [vmem:[%s1 + $0x20] sm:$0xff]
  %v898 = vld [vmem:[%s1 + $0x28] sm:$0xff]
  %v899 = vld [vmem:[%s1 + $0x30] sm:$0xff]
  %v900 = vld [vmem:[%s1 + $0x38] sm:$0xff]
  %v901 = vld [vmem:[%s1 + $0x40] sm:$0xff]
  %v902 = vld [vmem:[%s1 + $0x48] sm:$0xff]
  %v903 = vld [vmem:[%s1 + $0x50] sm:$0xff]
  %v904 = vld [vmem:[%s1 + $0x58] sm:$0xff]
  %v905 = vld [vmem:[%s1 + $0x60] sm:$0xff]
  %v906 = vld [vmem:[%s1 + $0x68] sm:$0xff]
  %v907 = vld [vmem:[%s1 + $0x70] sm:$0xff]
  %v908 = vld [vmem:[%s1 + $0x78] sm:$0xff]
  %v909 = vld [vmem:[%s1 + $0x80] sm:$0xff]
  %v910 = vld [vmem:[%s1 + $0x88] sm:$0xff]
  %v911 = vld [vmem:[%s1 + $0x90] sm:$0xff]
  %v912 = vld [vmem:[%s1 + $0x98] sm:$0xff]
  %v913 = vld [vmem:[%s1 + $0xa0] sm:$0xff]
  %v914 = vld [vmem:[%s1 + $0xa8] sm:$0xff]
  %v915 = vld [vmem:[%s1 + $0xb0] sm:$0xff]
  %v916 = vld [vmem:[%s1 + $0xb8] sm:$0xff]
  %v917 = vld [vmem:[%s1 + $0xc0] sm:$0xff]
  %v918 = vld [vmem:[%s1 + $0xc8] sm:$0xff]
  %v919 = vld [vmem:[%s1 + $0xd0] sm:$0xff]
  %v920 = vld [vmem:[%s1 + $0xd8] sm:$0xff]
  %v921 = vld [vmem:[%s1 + $0xe0] sm:$0xff]
  %v922 = vld [vmem:[%s1 + $0xe8] sm:$0xff]
  %v923 = vld [vmem:[%s1 + $0xf0] sm:$0xff]
  %v924 = vld [vmem:[%s1 + $0xf8] sm:$0xff]
  %v925 = vld [vmem:[%s1 + $0x100] sm:$0xff]
  %v926 = vld [vmem:[%s1 + $0x108] sm:$0xff]
  %v927 = vld [vmem:[%s1 + $0x110] sm:$0xff]
  %v928 = vld [vmem:[%s1 + $0x118] sm:$0xff]
  %v929 = vld [vmem:[%s1 + $0x120] sm:$0xff]
  %v930 = vld [vmem:[%s1 + $0x128] sm:$0xff]
  %v931 = vld [vmem:[%s1 + $0x130] sm:$0xff]
  %v932 = vld [vmem:[%s1 + $0x138] sm:$0xff]
  %v933 = vld [vmem:[%s1 + $0x140] sm:$0xff]
  %v934 = vld [vmem:[%s1 + $0x148] sm:$0xff]
  %v935 = vld [vmem:[%s1 + $0x150] sm:$0xff]
  %v936 = vld [vmem:[%s1 + $0x158] sm:$0xff]
  %v937 = vld [vmem:[%s1 + $0x160] sm:$0xff]
  %v938 = vld [vmem:[%s1 + $0x168] sm:$0xff]
  %v939 = vld [vmem:[%s1 + $0x170] sm:$0xff]
  %v940 = vld [vmem:[%s1 + $0x178] sm:$0xff]
  %v941 = vld [vmem:[%s1 + $0x180] sm:$0xff]
  %v942 = vld [vmem:[%s1 + $0x188] sm:$0xff]
  %v943 = vld [vmem:[%s1 + $0x190] sm:$0xff]
  %v944 = vld [vmem:[%s1 + $0x198] sm:$0xff]
  %v945 = vld [vmem:[%s1 + $0x1a0] sm:$0xff]
  %v946 = vld [vmem:[%s1 + $0x1a8] sm:$0xff]
  %v947 = vld [vmem:[%s1 + $0x1b0] sm:$0xff]
  %v948 = vld [vmem:[%s1 + $0x1b8] sm:$0xff]
  %v949 = vld [vmem:[%s1 + $0x1c0] sm:$0xff]
  %v950 = vld [vmem:[%s1 + $0x1c8] sm:$0xff]
  %v951 = vld [vmem:[%s1 + $0x1d0] sm:$0xff]
  %v952 = vld [vmem:[%s1 + $0x1d8] sm:$0xff]
  %v953 = vld [vmem:[%s1 + $0x1e0] sm:$0xff]
  %v954 = vld [vmem:[%s1 + $0x1e8] sm:$0xff]
  %v955 = vld [vmem:[%s1 + $0x1f0] sm:$0xff]
  %v956 = vld [vmem:[%s1 + $0x1f8] sm:$0xff]
  %957 = vmatprep.subr.mxu0 %v894
  %958 = vmatpush1.msra.mxu0 %v893
  %959 = vmatprep.subr.mxu0 %v896
  %960 = vmatpush1.msra.mxu0 %v895
  %961 = vmatprep.subr.mxu0 %v898
  %962 = vmatpush1.msra.mxu0 %v897
  %963 = vmatprep.subr.mxu0 %v900
  %964 = vmatpush1.msra.mxu0 %v899
  %965 = vmatprep.subr.mxu0 %v902
  %966 = vmatpush1.msra.mxu0 %v901
  %967 = vmatprep.subr.mxu0 %v904
  %968 = vmatpush1.msra.mxu0 %v903
  %969 = vmatprep.subr.mxu0 %v906
  %970 = vmatpush1.msra.mxu0 %v905
  %971 = vmatprep.subr.mxu0 %v908
  %972 = vmatpush1.msra.mxu0 %v907
  %973 = vmatprep.subr.mxu0 %v910
  %974 = vmatpush1.msra.mxu0 %v909
  %975 = vmatprep.subr.mxu0 %v912
  %976 = vmatpush1.msra.mxu0 %v911
  %977 = vmatprep.subr.mxu0 %v914
  %978 = vmatpush1.msra.mxu0 %v913
  %979 = vmatprep.subr.mxu0 %v916
  %980 = vmatpush1.msra.mxu0 %v915
  %981 = vmatprep.subr.mxu0 %v918
  %982 = vmatpush1.msra.mxu0 %v917
  %983 = vmatprep.subr.mxu0 %v920
  %984 = vmatpush1.msra.mxu0 %v919
  %985 = vmatprep.subr.mxu0 %v922
  %986 = vmatpush1.msra.mxu0 %v921
  %987 = vmatprep.subr.mxu0 %v924
  %988 = vmatpush1.msra.mxu0 %v923
  %989 = vmatprep.subr.mxu0 %v926
  %990 = vmatpush1.msra.mxu0 %v925
  %991 = vmatprep.subr.mxu0 %v928
  %992 = vmatpush1.msra.mxu0 %v927
  %993 = vmatprep.subr.mxu0 %v930
  %994 = vmatpush1.msra.mxu0 %v929
  %995 = vmatprep.subr.mxu0 %v932
  %996 = vmatpush1.msra.mxu0 %v931
  %997 = vmatprep.subr.mxu0 %v934
  %998 = vmatpush1.msra.mxu0 %v933
  %999 = vmatprep.subr.mxu0 %v936
  %1000 = vmatpush1.msra.mxu0 %v935
  %1001 = vmatprep.subr.mxu0 %v938
  %1002 = vmatpush1.msra.mxu0 %v937
  %1003 = vmatprep.subr.mxu0 %v940
  %1004 = vmatpush1.msra.mxu0 %v939
  %1005 = vmatprep.subr.mxu0 %v942
  %1006 = vmatpush1.msra.mxu0 %v941
  %1007 = vmatprep.subr.mxu0 %v944
  %1008 = vmatpush1.msra.mxu0 %v943
  %1009 = vmatprep.subr.mxu0 %v946
  %1010 = vmatpush1.msra.mxu0 %v945
  %1011 = vmatprep.subr.mxu0 %v948
  %1012 = vmatpush1.msra.mxu0 %v947
  %1013 = vmatprep.subr.mxu0 %v950
  %1014 = vmatpush1.msra.mxu0 %v949
  %1015 = vmatprep.subr.mxu0 %v952
  %1016 = vmatpush1.msra.mxu0 %v951
  %1017 = vmatprep.subr.mxu0 %v954
  %1018 = vmatpush1.msra.mxu0 %v953
  %1019 = vmatprep.subr.mxu0 %v956
  %1020 = vmatpush1.msra.mxu0 %v955
  %1021 = vmatprep.mubr.f32.mxu0 %v886
  %1022 = vmatmul.mubr.f32.gmra.mrb[0].mxu0 %v885
  %v1023 = vpop.f32.mrb[0].mxu0
  %v1024 = vadd.f32 0.0, %v1023
  %v1025 = vpop.f32.mrb[0].mxu0
  %v1026 = vadd.f32 0.0, %v1025
  %1027 = vdwg.mxu0
  %v1028 = vadd.f32 %v891, %v1024
  %v1029 = vadd.f32 %v892, %v1026
  %v1030 = vmax.f32 %v1028, 0.0
  %v1031 = vmax.f32 %v1029, 0.0
  %s1032 = scalar_lea.vmem [#allocation3], 96
  %1033 = vst [vmem:[%s1032] sm:$0xff] %v1030
  %1034 = vst [vmem:[%s1032 + $0x8] sm:$0xff] %v1031
  %s1035 = scalar_lea.vmem %s0, 112
  %v1036 = vld [vmem:[%s1035] sm:$0xff]
  %v1037 = vld [vmem:[%s1035 + $0x8] sm:$0xff]
  %v1038 = vld [vmem:[%s1] sm:$0xff]
  %v1039 = vld [vmem:[%s1 + $0x8] sm:$0xff]
  %v1040 = vld [vmem:[%s1 + $0x10] sm:$0xff]
  %v1041 = vld [vmem:[%s1 + $0x18] sm:$0xff]
  %v1042 = vld [vmem:[%s1 + $0x20] sm:$0xff]
  %v1043 = vld [vmem:[%s1 + $0x28] sm:$0xff]
  %v1044 = vld [vmem:[%s1 + $0x30] sm:$0xff]
  %v1045 = vld [vmem:[%s1 + $0x38] sm:$0xff]
  %v1046 = vld [vmem:[%s1 + $0x40] sm:$0xff]
  %v1047 = vld [vmem:[%s1 + $0x48] sm:$0xff]
  %v1048 = vld [vmem:[%s1 + $0x50] sm:$0xff]
  %v1049 = vld [vmem:[%s1 + $0x58] sm:$0xff]
  %v1050 = vld [vmem:[%s1 + $0x60] sm:$0xff]
  %v1051 = vld [vmem:[%s1 + $0x68] sm:$0xff]
  %v1052 = vld [vmem:[%s1 + $0x70] sm:$0xff]
  %v1053 = vld [vmem:[%s1 + $0x78] sm:$0xff]
  %v1054 = vld [vmem:[%s1 + $0x80] sm:$0xff]
  %v1055 = vld [vmem:[%s1 + $0x88] sm:$0xff]
  %v1056 = vld [vmem:[%s1 + $0x90] sm:$0xff]
  %v1057 = vld [vmem:[%s1 + $0x98] sm:$0xff]
  %v1058 = vld [vmem:[%s1 + $0xa0] sm:$0xff]
  %v1059 = vld [vmem:[%s1 + $0xa8] sm:$0xff]
  %v1060 = vld [vmem:[%s1 + $0xb0] sm:$0xff]
  %v1061 = vld [vmem:[%s1 + $0xb8] sm:$0xff]
  %v1062 = vld [vmem:[%s1 + $0xc0] sm:$0xff]
  %v1063 = vld [vmem:[%s1 + $0xc8] sm:$0xff]
  %v1064 = vld [vmem:[%s1 + $0xd0] sm:$0xff]
  %v1065 = vld [vmem:[%s1 + $0xd8] sm:$0xff]
  %v1066 = vld [vmem:[%s1 + $0xe0] sm:$0xff]
  %v1067 = vld [vmem:[%s1 + $0xe8] sm:$0xff]
  %v1068 = vld [vmem:[%s1 + $0xf0] sm:$0xff]
  %v1069 = vld [vmem:[%s1 + $0xf8] sm:$0xff]
  %v1070 = vld [vmem:[%s1 + $0x100] sm:$0xff]
  %v1071 = vld [vmem:[%s1 + $0x108] sm:$0xff]
  %v1072 = vld [vmem:[%s1 + $0x110] sm:$0xff]
  %v1073 = vld [vmem:[%s1 + $0x118] sm:$0xff]
  %v1074 = vld [vmem:[%s1 + $0x120] sm:$0xff]
  %v1075 = vld [vmem:[%s1 + $0x128] sm:$0xff]
  %v1076 = vld [vmem:[%s1 + $0x130] sm:$0xff]
  %v1077 = vld [vmem:[%s1 + $0x138] sm:$0xff]
  %v1078 = vld [vmem:[%s1 + $0x140] sm:$0xff]
  %v1079 = vld [vmem:[%s1 + $0x148] sm:$0xff]
  %v1080 = vld [vmem:[%s1 + $0x150] sm:$0xff]
  %v1081 = vld [vmem:[%s1 + $0x158] sm:$0xff]
  %v1082 = vld [vmem:[%s1 + $0x160] sm:$0xff]
  %v1083 = vld [vmem:[%s1 + $0x168] sm:$0xff]
  %v1084 = vld [vmem:[%s1 + $0x170] sm:$0xff]
  %v1085 = vld [vmem:[%s1 + $0x178] sm:$0xff]
  %v1086 = vld [vmem:[%s1 + $0x180] sm:$0xff]
  %v1087 = vld [vmem:[%s1 + $0x188] sm:$0xff]
  %v1088 = vld [vmem:[%s1 + $0x190] sm:$0xff]
  %v1089 = vld [vmem:[%s1 + $0x198] sm:$0xff]
  %v1090 = vld [vmem:[%s1 + $0x1a0] sm:$0xff]
  %v1091 = vld [vmem:[%s1 + $0x1a8] sm:$0xff]
  %v1092 = vld [vmem:[%s1 + $0x1b0] sm:$0xff]
  %v1093 = vld [vmem:[%s1 + $0x1b8] sm:$0xff]
  %v1094 = vld [vmem:[%s1 + $0x1c0] sm:$0xff]
  %v1095 = vld [vmem:[%s1 + $0x1c8] sm:$0xff]
  %v1096 = vld [vmem:[%s1 + $0x1d0] sm:$0xff]
  %v1097 = vld [vmem:[%s1 + $0x1d8] sm:$0xff]
  %v1098 = vld [vmem:[%s1 + $0x1e0] sm:$0xff]
  %v1099 = vld [vmem:[%s1 + $0x1e8] sm:$0xff]
  %v1100 = vld [vmem:[%s1 + $0x1f0] sm:$0xff]
  %v1101 = vld [vmem:[%s1 + $0x1f8] sm:$0xff]
  %1102 = vmatprep.subr.mxu0 %v1039
  %1103 = vmatpush1.msra.mxu0 %v1038
  %1104 = vmatprep.subr.mxu0 %v1041
  %1105 = vmatpush1.msra.mxu0 %v1040
  %1106 = vmatprep.subr.mxu0 %v1043
  %1107 = vmatpush1.msra.mxu0 %v1042
  %1108 = vmatprep.subr.mxu0 %v1045
  %1109 = vmatpush1.msra.mxu0 %v1044
  %1110 = vmatprep.subr.mxu0 %v1047
  %1111 = vmatpush1.msra.mxu0 %v1046
  %1112 = vmatprep.subr.mxu0 %v1049
  %1113 = vmatpush1.msra.mxu0 %v1048
  %1114 = vmatprep.subr.mxu0 %v1051
  %1115 = vmatpush1.msra.mxu0 %v1050
  %1116 = vmatprep.subr.mxu0 %v1053
  %1117 = vmatpush1.msra.mxu0 %v1052
  %1118 = vmatprep.subr.mxu0 %v1055
  %1119 = vmatpush1.msra.mxu0 %v1054
  %1120 = vmatprep.subr.mxu0 %v1057
  %1121 = vmatpush1.msra.mxu0 %v1056
  %1122 = vmatprep.subr.mxu0 %v1059
  %1123 = vmatpush1.msra.mxu0 %v1058
  %1124 = vmatprep.subr.mxu0 %v1061
  %1125 = vmatpush1.msra.mxu0 %v1060
  %1126 = vmatprep.subr.mxu0 %v1063
  %1127 = vmatpush1.msra.mxu0 %v1062
  %1128 = vmatprep.subr.mxu0 %v1065
  %1129 = vmatpush1.msra.mxu0 %v1064
  %1130 = vmatprep.subr.mxu0 %v1067
  %1131 = vmatpush1.msra.mxu0 %v1066
  %1132 = vmatprep.subr.mxu0 %v1069
  %1133 = vmatpush1.msra.mxu0 %v1068
  %1134 = vmatprep.subr.mxu0 %v1071
  %1135 = vmatpush1.msra.mxu0 %v1070
  %1136 = vmatprep.subr.mxu0 %v1073
  %1137 = vmatpush1.msra.mxu0 %v1072
  %1138 = vmatprep.subr.mxu0 %v1075
  %1139 = vmatpush1.msra.mxu0 %v1074
  %1140 = vmatprep.subr.mxu0 %v1077
  %1141 = vmatpush1.msra.mxu0 %v1076
  %1142 = vmatprep.subr.mxu0 %v1079
  %1143 = vmatpush1.msra.mxu0 %v1078
  %1144 = vmatprep.subr.mxu0 %v1081
  %1145 = vmatpush1.msra.mxu0 %v1080
  %1146 = vmatprep.subr.mxu0 %v1083
  %1147 = vmatpush1.msra.mxu0 %v1082
  %1148 = vmatprep.subr.mxu0 %v1085
  %1149 = vmatpush1.msra.mxu0 %v1084
  %1150 = vmatprep.subr.mxu0 %v1087
  %1151 = vmatpush1.msra.mxu0 %v1086
  %1152 = vmatprep.subr.mxu0 %v1089
  %1153 = vmatpush1.msra.mxu0 %v1088
  %1154 = vmatprep.subr.mxu0 %v1091
  %1155 = vmatpush1.msra.mxu0 %v1090
  %1156 = vmatprep.subr.mxu0 %v1093
  %1157 = vmatpush1.msra.mxu0 %v1092
  %1158 = vmatprep.subr.mxu0 %v1095
  %1159 = vmatpush1.msra.mxu0 %v1094
  %1160 = vmatprep.subr.mxu0 %v1097
  %1161 = vmatpush1.msra.mxu0 %v1096
  %1162 = vmatprep.subr.mxu0 %v1099
  %1163 = vmatpush1.msra.mxu0 %v1098
  %1164 = vmatprep.subr.mxu0 %v1101
  %1165 = vmatpush1.msra.mxu0 %v1100
  %1166 = vmatprep.mubr.f32.mxu0 %v1031
  %1167 = vmatmul.mubr.f32.gmra.mrb[0].mxu0 %v1030
  %v1168 = vpop.f32.mrb[0].mxu0
  %v1169 = vadd.f32 0.0, %v1168
  %v1170 = vpop.f32.mrb[0].mxu0
  %v1171 = vadd.f32 0.0, %v1170
  %1172 = vdwg.mxu0
  %v1173 = vadd.f32 %v1036, %v1169
  %v1174 = vadd.f32 %v1037, %v1171
  %v1175 = vmax.f32 %v1173, 0.0
  %v1176 = vmax.f32 %v1174, 0.0
  %s1177 = scalar_lea.vmem [#allocation3], 112
  %1178 = vst [vmem:[%s1177] sm:$0xff] %v1175
  %1179 = vst [vmem:[%s1177 + $0x8] sm:$0xff] %v1176
  %1180 = vst [vmem:[#allocation2] sm:$0xff] %v1175
  %1181 = vst [vmem:[#allocation2 + $0x8] sm:$0xff] %v1176
  %v1182 = vld [vmem:[#allocation3] sm:$0xff]
  %v1183 = vld [vmem:[#allocation3 + $0x8] sm:$0xff]
  %v1184 = vld [vmem:[#allocation3 + $0x10] sm:$0xff]
  %v1185 = vld [vmem:[#allocation3 + $0x18] sm:$0xff]
  %v1186 = vld [vmem:[#allocation3 + $0x20] sm:$0xff]
  %v1187 = vld [vmem:[#allocation3 + $0x28] sm:$0xff]
  %v1188 = vld [vmem:[#allocation3 + $0x30] sm:$0xff]
  %v1189 = vld [vmem:[#allocation3 + $0x38] sm:$0xff]
  %v1190 = vld [vmem:[#allocation3 + $0x40] sm:$0xff]
  %v1191 = vld [vmem:[#allocation3 + $0x48] sm:$0xff]
  %v1192 = vld [vmem:[#allocation3 + $0x50] sm:$0xff]
  %v1193 = vld [vmem:[#allocation3 + $0x58] sm:$0xff]
  %v1194 = vld [vmem:[#allocation3 + $0x60] sm:$0xff]
  %v1195 = vld [vmem:[#allocation3 + $0x68] sm:$0xff]
  %v1196 = vld [vmem:[#allocation3 + $0x70] sm:$0xff]
  %v1197 = vld [vmem:[#allocation3 + $0x78] sm:$0xff]
  %v1198 = vld [vmem:[%s2] sm:$0xff]
  %v1199 = vld [vmem:[%s2 + $0x8] sm:$0xff]
  %v1200 = vld [vmem:[%s2 + $0x10] sm:$0xff]
  %v1201 = vld [vmem:[%s2 + $0x18] sm:$0xff]
  %v1202 = vld [vmem:[%s2 + $0x20] sm:$0xff]
  %v1203 = vld [vmem:[%s2 + $0x28] sm:$0xff]
  %v1204 = vld [vmem:[%s2 + $0x30] sm:$0xff]
  %v1205 = vld [vmem:[%s2 + $0x38] sm:$0xff]
  %v1206 = vld [vmem:[%s2 + $0x40] sm:$0xff]
  %v1207 = vld [vmem:[%s2 + $0x48] sm:$0xff]
  %v1208 = vld [vmem:[%s2 + $0x50] sm:$0xff]
  %v1209 = vld [vmem:[%s2 + $0x58] sm:$0xff]
  %v1210 = vld [vmem:[%s2 + $0x60] sm:$0xff]
  %v1211 = vld [vmem:[%s2 + $0x68] sm:$0xff]
  %v1212 = vld [vmem:[%s2 + $0x70] sm:$0xff]
  %v1213 = vld [vmem:[%s2 + $0x78] sm:$0xff]
  %v1214 = vld [vmem:[%s2 + $0x80] sm:$0xff]
  %v1215 = vld [vmem:[%s2 + $0x88] sm:$0xff]
  %v1216 = vld [vmem:[%s2 + $0x90] sm:$0xff]
  %v1217 = vld [vmem:[%s2 + $0x98] sm:$0xff]
  %v1218 = vld [vmem:[%s2 + $0xa0] sm:$0xff]
  %v1219 = vld [vmem:[%s2 + $0xa8] sm:$0xff]
  %v1220 = vld [vmem:[%s2 + $0xb0] sm:$0xff]
  %v1221 = vld [vmem:[%s2 + $0xb8] sm:$0xff]
  %v1222 = vld [vmem:[%s2 + $0xc0] sm:$0xff]
  %v1223 = vld [vmem:[%s2 + $0xc8] sm:$0xff]
  %v1224 = vld [vmem:[%s2 + $0xd0] sm:$0xff]
  %v1225 = vld [vmem:[%s2 + $0xd8] sm:$0xff]
  %v1226 = vld [vmem:[%s2 + $0xe0] sm:$0xff]
  %v1227 = vld [vmem:[%s2 + $0xe8] sm:$0xff]
  %v1228 = vld [vmem:[%s2 + $0xf0] sm:$0xff]
  %v1229 = vld [vmem:[%s2 + $0xf8] sm:$0xff]
  %1230 = vmatprep.subr.mxu0 0.0
  %1231 = vmatpush1.msra.mxu0 %v1198
  %1232 = vmatprep.subr.mxu0 0.0
  %1233 = vmatpush1.msra.mxu0 %v1199
  %1234 = vmatprep.subr.mxu0 0.0
  %1235 = vmatpush1.msra.mxu0 %v1200
  %1236 = vmatprep.subr.mxu0 0.0
  %1237 = vmatpush1.msra.mxu0 %v1201
  %1238 = vmatprep.subr.mxu0 0.0
  %1239 = vmatpush1.msra.mxu0 %v1202
  %1240 = vmatprep.subr.mxu0 0.0
  %1241 = vmatpush1.msra.mxu0 %v1203
  %1242 = vmatprep.subr.mxu0 0.0
  %1243 = vmatpush1.msra.mxu0 %v1204
  %1244 = vmatprep.subr.mxu0 0.0
  %1245 = vmatpush1.msra.mxu0 %v1205
  %1246 = vmatprep.subr.mxu0 0.0
  %1247 = vmatpush1.msra.mxu0 %v1206
  %1248 = vmatprep.subr.mxu0 0.0
  %1249 = vmatpush1.msra.mxu0 %v1207
  %1250 = vmatprep.subr.mxu0 0.0
  %1251 = vmatpush1.msra.mxu0 %v1208
  %1252 = vmatprep.subr.mxu0 0.0
  %1253 = vmatpush1.msra.mxu0 %v1209
  %1254 = vmatprep.subr.mxu0 0.0
  %1255 = vmatpush1.msra.mxu0 %v1210
  %1256 = vmatprep.subr.mxu0 0.0
  %1257 = vmatpush1.msra.mxu0 %v1211
  %1258 = vmatprep.subr.mxu0 0.0
  %1259 = vmatpush1.msra.mxu0 %v1212
  %1260 = vmatprep.subr.mxu0 0.0
  %1261 = vmatpush1.msra.mxu0 %v1213
  %1262 = vmatprep.subr.mxu0 0.0
  %1263 = vmatpush1.msra.mxu0 %v1214
  %1264 = vmatprep.subr.mxu0 0.0
  %1265 = vmatpush1.msra.mxu0 %v1215
  %1266 = vmatprep.subr.mxu0 0.0
  %1267 = vmatpush1.msra.mxu0 %v1216
  %1268 = vmatprep.subr.mxu0 0.0
  %1269 = vmatpush1.msra.mxu0 %v1217
  %1270 = vmatprep.subr.mxu0 0.0
  %1271 = vmatpush1.msra.mxu0 %v1218
  %1272 = vmatprep.subr.mxu0 0.0
  %1273 = vmatpush1.msra.mxu0 %v1219
  %1274 = vmatprep.subr.mxu0 0.0
  %1275 = vmatpush1.msra.mxu0 %v1220
  %1276 = vmatprep.subr.mxu0 0.0
  %1277 = vmatpush1.msra.mxu0 %v1221
  %1278 = vmatprep.subr.mxu0 0.0
  %1279 = vmatpush1.msra.mxu0 %v1222
  %1280 = vmatprep.subr.mxu0 0.0
  %1281 = vmatpush1.msra.mxu0 %v1223
  %1282 = vmatprep.subr.mxu0 0.0
  %1283 = vmatpush1.msra.mxu0 %v1224
  %1284 = vmatprep.subr.mxu0 0.0
  %1285 = vmatpush1.msra.mxu0 %v1225
  %1286 = vmatprep.subr.mxu0 0.0
  %1287 = vmatpush1.msra.mxu0 %v1226
  %1288 = vmatprep.subr.mxu0 0.0
  %1289 = vmatpush1.msra.mxu0 %v1227
  %1290 = vmatprep.subr.mxu0 0.0
  %1291 = vmatpush1.msra.mxu0 %v1228
  %1292 = vmatprep.subr.mxu0 0.0
  %1293 = vmatpush1.msra.mxu0 %v1229
  %1294 = vmatprep.mubr.f32.mxu0 %v1183
  %1295 = vmatmul.mubr.f32.gmra.mrb[0].mxu0 %v1182
  %v1296 = vpop.f32.mrb[0].mxu0
  %v1297 = vadd.f32 0.0, %v1296
  %v1298 = vpop.f32.mrb[0].mxu0
  %1299 = vmatprep.mubr.f32.mxu0 %v1185
  %1300 = vmatmul.mubr.f32.gmra.mrb[0].mxu0 %v1184
  %v1301 = vpop.f32.mrb[0].mxu0
  %v1302 = vadd.f32 0.0, %v1301
  %v1303 = vpop.f32.mrb[0].mxu0
  %1304 = vmatprep.mubr.f32.mxu0 %v1187
  %1305 = vmatmul.mubr.f32.gmra.mrb[0].mxu0 %v1186
  %v1306 = vpop.f32.mrb[0].mxu0
  %v1307 = vadd.f32 0.0, %v1306
  %v1308 = vpop.f32.mrb[0].mxu0
  %1309 = vmatprep.mubr.f32.mxu0 %v1189
  %1310 = vmatmul.mubr.f32.gmra.mrb[0].mxu0 %v1188
  %v1311 = vpop.f32.mrb[0].mxu0
  %v1312 = vadd.f32 0.0, %v1311
  %v1313 = vpop.f32.mrb[0].mxu0
  %1314 = vmatprep.mubr.f32.mxu0 %v1191
  %1315 = vmatmul.mubr.f32.gmra.mrb[0].mxu0 %v1190
  %v1316 = vpop.f32.mrb[0].mxu0
  %v1317 = vadd.f32 0.0, %v1316
  %v1318 = vpop.f32.mrb[0].mxu0
  %1319 = vmatprep.mubr.f32.mxu0 %v1193
  %1320 = vmatmul.mubr.f32.gmra.mrb[0].mxu0 %v1192
  %v1321 = vpop.f32.mrb[0].mxu0
  %v1322 = vadd.f32 0.0, %v1321
  %v1323 = vpop.f32.mrb[0].mxu0
  %1324 = vmatprep.mubr.f32.mxu0 %v1195
  %1325 = vmatmul.mubr.f32.gmra.mrb[0].mxu0 %v1194
  %v1326 = vpop.f32.mrb[0].mxu0
  %v1327 = vadd.f32 0.0, %v1326
  %v1328 = vpop.f32.mrb[0].mxu0
  %1329 = vmatprep.mubr.f32.mxu0 %v1197
  %1330 = vmatmul.mubr.f32.gmra.mrb[0].mxu0 %v1196
  %v1331 = vpop.f32.mrb[0].mxu0
  %v1332 = vadd.f32 0.0, %v1331
  %v1333 = vpop.f32.mrb[0].mxu0
  %1334 = vdwg.mxu0
  %1335 = vst [vmem:[%s3] sm:$0xff] %v1297
  %1336 = vst [vmem:[%s3 + $0x8] sm:$0xff] %v1302
  %1337 = vst [vmem:[%s3 + $0x10] sm:$0xff] %v1307
  %1338 = vst [vmem:[%s3 + $0x18] sm:$0xff] %v1312
  %1339 = vst [vmem:[%s3 + $0x20] sm:$0xff] %v1317
  %1340 = vst [vmem:[%s3 + $0x28] sm:$0xff] %v1322
  %1341 = vst [vmem:[%s3 + $0x30] sm:$0xff] %v1327
  %1342 = vst [vmem:[%s3 + $0x38] sm:$0xff] %v1332
  // Predicated region
  $region18: #{rnn_model_forward.1} parent=0 // pred_check
    _
  $region19: #{rnn_model_forward.1} parent=0 // pred_check_branch
    %1344 = sbr.rel (0) target = $region21
  $region20: #{rnn_model_forward.1} parent=0 // pred_region
    _
  $region21: #{rnn_model_forward.1} parent=0 // pred_fallthru
    _
  // Predicated region
  $region22: #{rnn_model_forward.1} parent=0 // pred_check
    _
  $region23: #{rnn_model_forward.1} parent=0 // pred_check_branch
    %1346 = sbr.rel (0) target = $region25
  $region24: #{rnn_model_forward.1} parent=0 // pred_region
    _
  $region25: #{rnn_model_forward.1} parent=0 // pred_fallthru
    _

</llo_original>
